<compile_context>
chip_gen: v7x
topology: tpu7x:2x2x1
jax: 0.10.0
libtpu: 0.0.40
codegen_flags: <defaults>
</compile_context>

<pallas_src>
import math
import numpy as np

import jax
import jax.numpy as jnp
from jax.experimental import pallas as pl
from jax.experimental.pallas import tpu as pltpu


# Operand dtype for the in-loop MLP matmuls (accumulation is always f32).
MXU_DTYPE = jnp.bfloat16


# --------------------------------------------------------------------------
# helpers (same math as the torch reference)
# --------------------------------------------------------------------------
def _safe_divide(numerator, denominator, eps=1e-7):
    safe_den = jnp.where(
        jnp.abs(denominator) > eps,
        denominator,
        jnp.sign(denominator) * jnp.full_like(denominator, eps),
    )
    return numerator / safe_den


# --------------------------------------------------------------------------
# Pallas kernel
# --------------------------------------------------------------------------
def make_sde_kernel(B, T, L, H, dt, noise_std):
    sqrt_dt = math.sqrt(dt)
    log_noise_std = math.log(noise_std)
    half_log_2pi = 0.5 * math.log(2.0 * math.pi)
    inv_2var = 0.5 / (noise_std * noise_std)

    def kernel(
        # inputs
        xs_ref, eps0_ref, dw_ref,
        w_qz0_ref, b_qz0_ref,
        w_ctx2_ref, b_ctx2_ref,
        w1_ref, w2_ref, b2_ref,
        w_proj_ref, b_proj_ref,
        imass_ref, diff_sdt_ref,
        pz0_mean_ref, pz0_logstd_ref,
        # outputs
        neg_log_pxs_ref, dkl_ref,
        # scratch
        ctx2_scr, traj_scr, dw_scr,
    ):
        xs = xs_ref[...]                                            # [T*B, D]

        # ---- prologue ------------------------------------------------------
        # Context table for the fused MLP first layer, one wide matmul over all
        # T*B rows (encoder Linear already folded into w_ctx2 / b_ctx2 on host).
        # Lanes [:H]  -> constant prior bias b_h1
        # Lanes [H:]  -> enc(xs_i) @ w_c1_enc + xs_i @ w_c1_x + b_c1
        ctx2_scr[...] = (
            jnp.dot(xs, w_ctx2_ref[...], preferred_element_type=jnp.float32)
            + b_ctx2_ref[...])

        # Pre-scale Brownian increments once: diffusion * sqrt(dt) * dw
        dw_scr[...] = dw_ref[...] * diff_sdt_ref[...]

        # qz0_net(ctx[:, 0, :]) with encoder folded in -> reparameterized z0
        qz0 = (jnp.dot(xs[0:B, :], w_qz0_ref[...],
                       preferred_element_type=jnp.float32) + b_qz0_ref[...])
        qz0_mean = qz0[:, : 2 * L]
        qz0_logstd = qz0[:, 2 * L:]
        pm = qz0_mean + jnp.exp(qz0_logstd) * eps0_ref[...]          # [B, 2L]
        traj_scr[0:B, :] = pm

        # Hoisted broadcasts / constants (JAX does not CSE broadcast_in_dim).
        imass_dt = jnp.broadcast_to(imass_ref[...] * dt, (B, L))
        b2 = jnp.broadcast_to(b2_ref[...], (B, 2 * L))
        w1 = w1_ref[...]                                             # [2L, 2H]
        w2 = w2_ref[...]                                             # [2H, 2L]

        dkl_acc = jnp.zeros((B, 1), jnp.float32)

        # ---- Euler-Maruyama loop, fully unrolled (short fixed trip count) ---
        for k in range(T - 1):
            row = (k + 1) * B            # ctx index i = min(k+1, T-1) == k+1
            # Fused prior+posterior layer 1: one matmul + one tanh.
            hid = jnp.tanh(
                jnp.dot(pm.astype(w1.dtype), w1,
                        preferred_element_type=jnp.float32)
                + ctx2_scr[row:row + B, :])                          # [B, 2H]
            # Fused layer 2 (scales pre-folded on host):
            #   out2[:, :L] = (prior - posterior) * sqrt(dt)/diffusion
            #   out2[:, L:] = posterior * dt
            out2 = jnp.dot(hid.astype(w2.dtype), w2,
                           preferred_element_type=jnp.float32) + b2  # [B, 2L]
            # dkl drift (dt and 1/diffusion already folded into out2[:, :L]).
            dkl_acc = dkl_acc + jnp.sum(jnp.square(out2[:, :L]),
                                        axis=-1, keepdims=True)
            # Packed state update: [pos + imass*mom*dt | mom + post*dt + noise]
            noise = dw_scr[k * B:(k + 1) * B, :]
            pm = pm + jnp.concatenate(
                [imass_dt * pm[:, L:], out2[:, L:] + noise], axis=-1)
            traj_scr[row:row + B, :] = pm

        # ---- projector + Gaussian log-likelihood -----------------------------
        # w_proj is zero-padded over the momentum half, so (pos|mom) @ w_proj_pad
        # equals positions @ projector.
        xs_pred = (jnp.dot(traj_scr[...], w_proj_ref[...],
                           preferred_element_type=jnp.float32) + b_proj_ref[...])
        logp = (-jnp.square(xs - xs_pred) * inv_2var
                - (log_noise_std + half_log_2pi))                    # [T*B, D]
        logp_rows = jnp.sum(logp, axis=-1, keepdims=True)            # [T*B, 1]
        log_pxs = jnp.sum(logp_rows, axis=0, keepdims=True) / B      # [1, 1]
        neg_log_pxs_ref[...] = -log_pxs

        # ---- KL(qz0 || pz0) + path KL ----------------------------------------
        pz0_mean = pz0_mean_ref[...]
        pz0_logstd = pz0_logstd_ref[...]
        q_var = jnp.exp(2.0 * qz0_logstd)
        p_var = jnp.exp(2.0 * pz0_logstd)
        kl0 = ((pz0_logstd - qz0_logstd)
               + (q_var + jnp.square(qz0_mean - pz0_mean)) / (2.0 * p_var)
               - 0.5)                                                # [B, 2L]
        kl0_rows = jnp.sum(kl0, axis=-1, keepdims=True)              # [B, 1]
        dkl0 = jnp.sum(kl0_rows, axis=0, keepdims=True) / B          # [1, 1]
        dkl_path = jnp.sum(dkl_acc, axis=0, keepdims=True) / B       # [1, 1]
        dkl_ref[...] = dkl_path + dkl0

    return kernel


# --------------------------------------------------------------------------
# parameter construction (deterministic, torch.nn.Linear-style init)
# --------------------------------------------------------------------------
def init_params(key, D, L, C, H):
    def linear(k, fan_in, fan_out):
        k1, k2 = jax.random.split(k)
        bound = 1.0 / math.sqrt(fan_in)
        w = jax.random.uniform(k1, (fan_in, fan_out), jnp.float32, -bound, bound)
        b = jax.random.uniform(k2, (1, fan_out), jnp.float32, -bound, bound)
        return w, b

    ks = jax.random.split(key, 7)
    p = {}
    p["w_enc"], p["b_enc"] = linear(ks[0], D, C)
    p["w_qz0"], p["b_qz0"] = linear(ks[1], C + D, 4 * L)
    p["w_h1"], p["b_h1"] = linear(ks[2], 2 * L, H)          # p_net layer 1
    p["w_h2"], p["b_h2"] = linear(ks[3], H, L)              # p_net layer 2
    p["w_c1"], p["b_c1"] = linear(ks[4], 2 * L + C + D, H)  # q_net layer 1
    p["w_c2"], p["b_c2"] = linear(ks[5], H, L)              # q_net layer 2
    p["w_proj"], p["b_proj"] = linear(ks[6], L, D)
    p["pz0_mean"] = jnp.zeros((1, 2 * L), jnp.float32)
    p["pz0_logstd"] = jnp.zeros((1, 2 * L), jnp.float32)
    gamma = jnp.ones((1, L), jnp.float32)
    beta = 1.0 / 3.0
    p["inverse_mass"] = jnp.ones((1, L), jnp.float32)
    p["diffusion"] = jnp.sqrt(2.0 * gamma / beta)           # fixed diffusion
    return p


# --------------------------------------------------------------------------
# wrapper: algebraic weight folding / fusion + pallas_call
# --------------------------------------------------------------------------
def second_order_latent_sde_forward(params, xs, eps0, dw, *, L, C, H,
                                    noise_std, dt, mxu_dtype=MXU_DTYPE):
    B, T, D = xs.shape
    assert B % 8 == 0, "batch must be a multiple of 8 (f32 sublane tile)"

    xs_flat = jnp.transpose(xs, (1, 0, 2)).reshape(T * B, D)   # time-major
    dw_flat = dw.reshape((T - 1) * B, L)

    w_enc, b_enc = params["w_enc"], params["b_enc"]

    # --- fold encoder Linear into qz0_net (exact: everything is linear) ---
    w_qz0_enc, w_qz0_x = params["w_qz0"][:C], params["w_qz0"][C:]
    w_qz0_fold = w_enc @ w_qz0_enc + w_qz0_x                       # [D, 4L]
    b_qz0_fold = b_enc @ w_qz0_enc + params["b_qz0"]               # [1, 4L]

    # --- fold encoder into the control-net context input; build ctx-table ---
    w_c1 = params["w_c1"]
    w_c1_pm = w_c1[:2 * L]                                         # [2L, H]
    w_c1_enc = w_c1[2 * L:2 * L + C]                               # [C, H]
    w_c1_x = w_c1[2 * L + C:]                                      # [D, H]
    w_ctx_c1 = w_enc @ w_c1_enc + w_c1_x                           # [D, H]
    b_ctx_c1 = b_enc @ w_c1_enc + params["b_c1"]                   # [1, H]
    w_ctx2 = jnp.concatenate(
        [jnp.zeros((D, H), jnp.float32), w_ctx_c1], axis=1)        # [D, 2H]
    b_ctx2 = jnp.concatenate([params["b_h1"], b_ctx_c1], axis=1)   # [1, 2H]

    # --- fuse prior/posterior first layers into one [2L, 2H] matmul ---
    w1 = jnp.concatenate([params["w_h1"], w_c1_pm], axis=1)        # [2L, 2H]

    # --- dkl safe-divide reciprocal + Brownian scale (parameter glue) ---
    diffusion = params["diffusion"]
    eps = 1e-7
    safe_den = jnp.where(jnp.abs(diffusion) > eps, diffusion,
                         jnp.sign(diffusion) * jnp.full_like(diffusion, eps))
    inv_diff = 1.0 / safe_den                                       # [1, L]
    diff_sqrt_dt = diffusion * math.sqrt(dt)                        # [1, L]
    scale_dkl = inv_diff * math.sqrt(dt)                            # [1, L]

    # --- fuse second layers, folding per-step scalings into the columns ---
    #     out2[:, :L] = (prior - posterior) * sqrt(dt)/diffusion
    #     out2[:, L:] = posterior * dt
    w_h2, w_c2 = params["w_h2"], params["w_c2"]
    w2_top = jnp.concatenate(
        [w_h2 * scale_dkl, jnp.zeros((H, L), jnp.float32)], axis=1)   # [H, 2L]
    w2_bot = jnp.concatenate([-w_c2 * scale_dkl, w_c2 * dt], axis=1)  # [H, 2L]
    w2 = jnp.concatenate([w2_top, w2_bot], axis=0)                    # [2H, 2L]
    b2 = jnp.concatenate(
        [(params["b_h2"] - params["b_c2"]) * scale_dkl,
         params["b_c2"] * dt], axis=1)                                # [1, 2L]

    # --- projector padded to take the packed [pos | mom] trajectory ---
    w_proj_pad = jnp.concatenate(
        [params["w_proj"], jnp.zeros((L, D), jnp.float32)], axis=0)  # [2L, D]

    args = (
        xs_flat, eps0, dw_flat,
        w_qz0_fold, b_qz0_fold,
        w_ctx2, b_ctx2,
        w1.astype(mxu_dtype), w2.astype(mxu_dtype), b2,
        w_proj_pad, params["b_proj"],
        params["inverse_mass"], diff_sqrt_dt,
        params["pz0_mean"], params["pz0_logstd"],
    )

    vmem_spec = lambda: pl.BlockSpec(memory_space=pltpu.MemorySpace.VMEM)
    fn = pl.pallas_call(
        make_sde_kernel(B, T, L, H, dt, noise_std),
        out_shape=(
            jax.ShapeDtypeStruct((1, 1), jnp.float32),   # -log p(x)
            jax.ShapeDtypeStruct((1, 1), jnp.float32),   # dkl
        ),
        in_specs=[vmem_spec() for _ in range(len(args))],
        out_specs=(vmem_spec(), vmem_spec()),
        scratch_shapes=[
            pltpu.VMEM((T * B, 2 * H), jnp.float32),       # ctx table
            pltpu.VMEM((T * B, 2 * L), jnp.float32),       # packed trajectory
            pltpu.VMEM(((T - 1) * B, L), jnp.float32),     # scaled noise
        ],
        compiler_params=pltpu.CompilerParams(
            vmem_limit_bytes=32 * 1024 * 1024),
        # TODO(synk): at production B, add a batch grid axis with
        # dimension_semantics=("parallel",) to shard across v7x's two TCs.
    )
    neg_log_pxs, dkl = fn(*args)
    return neg_log_pxs[0, 0], dkl[0, 0]


# --------------------------------------------------------------------------
# pure-JAX reference (mirrors the torch forward with the same noise draws)
# --------------------------------------------------------------------------
def reference_forward(params, xs, eps0, dw, *, L, noise_std, dt):
    B, T, D = xs.shape
    enc = xs @ params["w_enc"] + params["b_enc"]
    ctx = jnp.concatenate([enc, xs], -1)
    qz0 = ctx[:, 0, :] @ params["w_qz0"] + params["b_qz0"]
    qz0_mean, qz0_logstd = qz0[:, :2 * L], qz0[:, 2 * L:]
    z0 = qz0_mean + jnp.exp(qz0_logstd) * eps0
    pos, mom = z0[:, :L], z0[:, L:]
    dkl = jnp.zeros((B, 1), jnp.float32)
    positions = [pos]
    imass, diff = params["inverse_mass"], params["diffusion"]
    for k in range(T - 1):
        i = min(k + 1, T - 1)
        pm = jnp.concatenate([pos, mom], -1)
        pos_drift = imass * mom
        prior = jnp.tanh(pm @ params["w_h1"] + params["b_h1"]) @ params["w_h2"] + params["b_h2"]
        cin = jnp.concatenate([pm, ctx[:, i]], -1)
        post = jnp.tanh(cin @ params["w_c1"] + params["b_c1"]) @ params["w_c2"] + params["b_c2"]
        difference = prior - post
        mom_diff = jnp.broadcast_to(diff, (B, L))
        dkl_drift = jnp.sum(jnp.square(_safe_divide(difference, mom_diff)),
                            -1, keepdims=True)
        new_pos = pos + pos_drift * dt
        new_mom = mom + post * dt + mom_diff * math.sqrt(dt) * dw[k]
        dkl = dkl + dkl_drift * dt
        pos, mom = new_pos, new_mom
        positions.append(pos)
    positions = jnp.stack(positions, axis=1)                   # [B, T, L]
    xs_pred = positions @ params["w_proj"] + params["b_proj"]
    logp = (-0.5 * jnp.square((xs - xs_pred) / noise_std)
            - math.log(noise_std) - 0.5 * math.log(2.0 * math.pi))
    log_pxs = jnp.mean(jnp.sum(logp, axis=(1, 2)))
    q_var = jnp.exp(2.0 * qz0_logstd)
    p_var = jnp.exp(2.0 * params["pz0_logstd"])
    kl0 = ((params["pz0_logstd"] - qz0_logstd)
           + (q_var + jnp.square(qz0_mean - params["pz0_mean"])) / (2.0 * p_var)
           - 0.5)
    dkl0 = jnp.mean(jnp.sum(kl0, axis=1))
    return -log_pxs, jnp.mean(dkl) + dkl0


# --------------------------------------------------------------------------
if __name__ == "__main__":
    # small shapes consistent with forward(xs: [batch, time, channels])
    B, T, D = 8, 8, 4           # batch, time, data_size
    L, C, H = 8, 16, 32         # latent_size, context_size, hidden_size
    dt = 0.1
    noise_std = 0.1

    key = jax.random.PRNGKey(0)
    k_params, k_xs, k_eps, k_dw = jax.random.split(key, 4)
    params = init_params(k_params, D, L, C, H)

    xs = jax.random.normal(k_xs, (B, T, D), jnp.float32)
    eps0 = jax.random.normal(k_eps, (B, 2 * L), jnp.float32)      # z0 reparam noise
    dw = jax.random.normal(k_dw, (T - 1, B, L), jnp.float32)      # Brownian increments (unit)

    neg_log_pxs, dkl = second_order_latent_sde_forward(
        params, xs, eps0, dw, L=L, C=C, H=H, noise_std=noise_std, dt=dt)
    neg_log_pxs = jax.block_until_ready(neg_log_pxs)
    dkl = jax.block_until_ready(dkl)

    ref_nlp, ref_dkl = reference_forward(
        params, xs, eps0, dw, L=L, noise_std=noise_std, dt=dt)

    # Tolerances account for bf16 MXU operands (f32 accumulation) in the loop.
    assert np.isfinite(float(neg_log_pxs)) and np.isfinite(float(dkl))
    assert np.allclose(float(neg_log_pxs), float(ref_nlp), rtol=5e-3, atol=5e-2), \
        (float(neg_log_pxs), float(ref_nlp))
    assert np.allclose(float(dkl), float(ref_dkl), rtol=5e-3, atol=5e-2), \
        (float(dkl), float(ref_dkl))
    print("KERNEL_OK")
</pallas_src>

<mosaic_0001>
module attributes {stable_mosaic.version = 11 : i64} {
  func.func @kernel(%arg0: memref<64x4xf32, #tpu.memory_space<vmem>>, %arg1: memref<8x16xf32, #tpu.memory_space<vmem>>, %arg2: memref<56x8xf32, #tpu.memory_space<vmem>>, %arg3: memref<4x32xf32, #tpu.memory_space<vmem>>, %arg4: memref<1x32xf32, #tpu.memory_space<vmem>>, %arg5: memref<4x64xf32, #tpu.memory_space<vmem>>, %arg6: memref<1x64xf32, #tpu.memory_space<vmem>>, %arg7: memref<16x64xbf16, #tpu.memory_space<vmem>>, %arg8: memref<64x16xbf16, #tpu.memory_space<vmem>>, %arg9: memref<1x16xf32, #tpu.memory_space<vmem>>, %arg10: memref<16x4xf32, #tpu.memory_space<vmem>>, %arg11: memref<1x4xf32, #tpu.memory_space<vmem>>, %arg12: memref<1x8xf32, #tpu.memory_space<vmem>>, %arg13: memref<1x8xf32, #tpu.memory_space<vmem>>, %arg14: memref<1x16xf32, #tpu.memory_space<vmem>>, %arg15: memref<1x16xf32, #tpu.memory_space<vmem>>, %arg16: memref<1x1xf32, #tpu.memory_space<vmem>>, %arg17: memref<1x1xf32, #tpu.memory_space<vmem>>, %arg18: memref<64x64xf32, #tpu.memory_space<vmem>>, %arg19: memref<64x16xf32, #tpu.memory_space<vmem>>, %arg20: memref<56x8xf32, #tpu.memory_space<vmem>>) attributes {dimension_semantics = [], scalar_prefetch = 0 : i64, scratch_operands = 3 : i64, tpu.core_type = #tpu.core_type<tc>} {
    %c0 = arith.constant 0 : index
    %c0_0 = arith.constant 0 : index
    %0 = vector.load %arg0[%c0, %c0_0] : memref<64x4xf32, #tpu.memory_space<vmem>>, vector<64x4xf32>
    %c0_1 = arith.constant 0 : index
    %c0_2 = arith.constant 0 : index
    %1 = vector.load %arg5[%c0_1, %c0_2] : memref<4x64xf32, #tpu.memory_space<vmem>>, vector<4x64xf32>
    %cst = arith.constant dense<0.000000e+00> : vector<64x64xf32>
    %2 = tpu.matmul %0, %1, %cst {dimension_numbers = #tpu.dot_dimension_numbers<[1], [0], [0], [1], [0, 0, 1, 1], [], []>} : vector<64x4xf32>, vector<4x64xf32>, vector<64x64xf32> -> vector<64x64xf32>
    %c0_3 = arith.constant 0 : index
    %c0_4 = arith.constant 0 : index
    %3 = vector.load %arg6[%c0_3, %c0_4] : memref<1x64xf32, #tpu.memory_space<vmem>>, vector<1x64xf32>
    %4 = vector.broadcast %3 : vector<1x64xf32> to vector<64x64xf32>
    %5 = arith.addf %2, %4 : vector<64x64xf32>
    %c0_5 = arith.constant 0 : index
    %c0_6 = arith.constant 0 : index
    %6 = vector.load %arg18[%c0_5, %c0_6] : memref<64x64xf32, #tpu.memory_space<vmem>>, vector<64x64xf32>
    tpu.vector_store %arg18[%c0_5, %c0_6], %5 {strides = array<i32>} : memref<64x64xf32, #tpu.memory_space<vmem>>, vector<64x64xf32>,
    %c0_7 = arith.constant 0 : index
    %c0_8 = arith.constant 0 : index
    %7 = vector.load %arg2[%c0_7, %c0_8] : memref<56x8xf32, #tpu.memory_space<vmem>>, vector<56x8xf32>
    %c0_9 = arith.constant 0 : index
    %c0_10 = arith.constant 0 : index
    %8 = vector.load %arg13[%c0_9, %c0_10] : memref<1x8xf32, #tpu.memory_space<vmem>>, vector<1x8xf32>
    %9 = vector.broadcast %8 : vector<1x8xf32> to vector<56x8xf32>
    %10 = arith.mulf %7, %9 : vector<56x8xf32>
    %c0_11 = arith.constant 0 : index
    %c0_12 = arith.constant 0 : index
    %11 = vector.load %arg20[%c0_11, %c0_12] : memref<56x8xf32, #tpu.memory_space<vmem>>, vector<56x8xf32>
    tpu.vector_store %arg20[%c0_11, %c0_12], %10 {strides = array<i32>} : memref<56x8xf32, #tpu.memory_space<vmem>>, vector<56x8xf32>,
    %12 = vector.extract_strided_slice %0 {offsets = [0, 0], sizes = [8, 4], strides = [1, 1]} : vector<64x4xf32> to vector<8x4xf32>
    %c0_13 = arith.constant 0 : index
    %c0_14 = arith.constant 0 : index
    %13 = vector.load %arg3[%c0_13, %c0_14] : memref<4x32xf32, #tpu.memory_space<vmem>>, vector<4x32xf32>
    %cst_15 = arith.constant dense<0.000000e+00> : vector<8x32xf32>
    %14 = tpu.matmul %12, %13, %cst_15 {dimension_numbers = #tpu.dot_dimension_numbers<[1], [0], [0], [1], [0, 0, 1, 1], [], []>} : vector<8x4xf32>, vector<4x32xf32>, vector<8x32xf32> -> vector<8x32xf32>
    %c0_16 = arith.constant 0 : index
    %c0_17 = arith.constant 0 : index
    %15 = vector.load %arg4[%c0_16, %c0_17] : memref<1x32xf32, #tpu.memory_space<vmem>>, vector<1x32xf32>
    %16 = vector.broadcast %15 : vector<1x32xf32> to vector<8x32xf32>
    %17 = arith.addf %14, %16 : vector<8x32xf32>
    %18 = vector.extract_strided_slice %17 {offsets = [0, 0], sizes = [8, 16], strides = [1, 1]} : vector<8x32xf32> to vector<8x16xf32>
    %19 = vector.extract_strided_slice %17 {offsets = [0, 16], sizes = [8, 16], strides = [1, 1]} : vector<8x32xf32> to vector<8x16xf32>
    %20 = math.exp %19 : vector<8x16xf32>
    %c0_18 = arith.constant 0 : index
    %c0_19 = arith.constant 0 : index
    %21 = vector.load %arg1[%c0_18, %c0_19] : memref<8x16xf32, #tpu.memory_space<vmem>>, vector<8x16xf32>
    %22 = arith.mulf %20, %21 : vector<8x16xf32>
    %23 = arith.addf %18, %22 : vector<8x16xf32>
    %c0_20 = arith.constant 0 : index
    %c0_21 = arith.constant 0 : index
    %24 = vector.load %arg19[%c0_20, %c0_21] : memref<64x16xf32, #tpu.memory_space<vmem>>, vector<8x16xf32>
    tpu.vector_store %arg19[%c0_20, %c0_21], %23 {strides = array<i32>} : memref<64x16xf32, #tpu.memory_space<vmem>>, vector<8x16xf32>,
    %c0_22 = arith.constant 0 : index
    %c0_23 = arith.constant 0 : index
    %25 = vector.load %arg12[%c0_22, %c0_23] : memref<1x8xf32, #tpu.memory_space<vmem>>, vector<1x8xf32>
    %cst_24 = arith.constant 1.000000e-01 : f32
    %26 = vector.broadcast %cst_24 : f32 to vector<1x8xf32>
    %27 = arith.mulf %25, %26 : vector<1x8xf32>
    %28 = vector.shape_cast %27 : vector<1x8xf32> to vector<1x8xf32>
    %29 = vector.broadcast %28 : vector<1x8xf32> to vector<8x8xf32>
    %c0_25 = arith.constant 0 : index
    %c0_26 = arith.constant 0 : index
    %30 = vector.load %arg9[%c0_25, %c0_26] : memref<1x16xf32, #tpu.memory_space<vmem>>, vector<1x16xf32>
    %31 = vector.shape_cast %30 : vector<1x16xf32> to vector<1x16xf32>
    %32 = vector.broadcast %31 : vector<1x16xf32> to vector<8x16xf32>
    %c0_27 = arith.constant 0 : index
    %c0_28 = arith.constant 0 : index
    %33 = vector.load %arg7[%c0_27, %c0_28] : memref<16x64xbf16, #tpu.memory_space<vmem>>, vector<16x64xbf16>
    %c0_29 = arith.constant 0 : index
    %c0_30 = arith.constant 0 : index
    %34 = vector.load %arg8[%c0_29, %c0_30] : memref<64x16xbf16, #tpu.memory_space<vmem>>, vector<64x16xbf16>
    %cst_31 = arith.constant 0.000000e+00 : f32
    %35 = vector.broadcast %cst_31 : f32 to vector<8x1xf32>
    %36 = arith.truncf %23 : vector<8x16xf32> to vector<8x16xbf16>
    %cst_32 = arith.constant dense<0.000000e+00> : vector<8x64xf32>
    %37 = tpu.matmul %36, %33, %cst_32 {dimension_numbers = #tpu.dot_dimension_numbers<[1], [0], [0], [1], [0, 0, 1, 1], [], []>} : vector<8x16xbf16>, vector<16x64xbf16>, vector<8x64xf32> -> vector<8x64xf32>
    %c8 = arith.constant 8 : index
    %c0_33 = arith.constant 0 : index
    %38 = vector.load %arg18[%c8, %c0_33] : memref<64x64xf32, #tpu.memory_space<vmem>>, vector<8x64xf32>
    %39 = arith.addf %37, %38 : vector<8x64xf32>
    %40 = math.tanh %39 : vector<8x64xf32>
    %41 = arith.truncf %40 : vector<8x64xf32> to vector<8x64xbf16>
    %cst_34 = arith.constant dense<0.000000e+00> : vector<8x16xf32>
    %42 = tpu.matmul %41, %34, %cst_34 {dimension_numbers = #tpu.dot_dimension_numbers<[1], [0], [0], [1], [0, 0, 1, 1], [], []>} : vector<8x64xbf16>, vector<64x16xbf16>, vector<8x16xf32> -> vector<8x16xf32>
    %43 = arith.addf %42, %32 : vector<8x16xf32>
    %44 = vector.extract_strided_slice %43 {offsets = [0, 0], sizes = [8, 8], strides = [1, 1]} : vector<8x16xf32> to vector<8x8xf32>
    %45 = arith.mulf %44, %44 : vector<8x8xf32>
    %cst_35 = arith.constant dense<0.000000e+00> : vector<8xf32>
    %46 = vector.multi_reduction <add>, %45, %cst_35 [1] : vector<8x8xf32> to vector<8xf32>
    %47 = vector.shape_cast %46 : vector<8xf32> to vector<8x1xf32>
    %48 = arith.addf %35, %47 : vector<8x1xf32>
    %c0_36 = arith.constant 0 : index
    %c0_37 = arith.constant 0 : index
    %49 = vector.load %arg20[%c0_36, %c0_37] : memref<56x8xf32, #tpu.memory_space<vmem>>, vector<8x8xf32>
    %50 = vector.extract_strided_slice %23 {offsets = [0, 8], sizes = [8, 8], strides = [1, 1]} : vector<8x16xf32> to vector<8x8xf32>
    %51 = arith.mulf %29, %50 : vector<8x8xf32>
    %52 = vector.extract_strided_slice %43 {offsets = [0, 8], sizes = [8, 8], strides = [1, 1]} : vector<8x16xf32> to vector<8x8xf32>
    %53 = arith.addf %52, %49 : vector<8x8xf32>
    %54 = tpu.concatenate %51, %53 in 1 : vector<8x8xf32>, vector<8x8xf32> -> vector<8x16xf32>
    %55 = arith.addf %23, %54 : vector<8x16xf32>
    %c8_38 = arith.constant 8 : index
    %c0_39 = arith.constant 0 : index
    %56 = vector.load %arg19[%c8_38, %c0_39] : memref<64x16xf32, #tpu.memory_space<vmem>>, vector<8x16xf32>
    tpu.vector_store %arg19[%c8_38, %c0_39], %55 {strides = array<i32>} : memref<64x16xf32, #tpu.memory_space<vmem>>, vector<8x16xf32>,
    %57 = arith.truncf %55 : vector<8x16xf32> to vector<8x16xbf16>
    %cst_40 = arith.constant dense<0.000000e+00> : vector<8x64xf32>
    %58 = tpu.matmul %57, %33, %cst_40 {dimension_numbers = #tpu.dot_dimension_numbers<[1], [0], [0], [1], [0, 0, 1, 1], [], []>} : vector<8x16xbf16>, vector<16x64xbf16>, vector<8x64xf32> -> vector<8x64xf32>
    %c16 = arith.constant 16 : index
    %c0_41 = arith.constant 0 : index
    %59 = vector.load %arg18[%c16, %c0_41] : memref<64x64xf32, #tpu.memory_space<vmem>>, vector<8x64xf32>
    %60 = arith.addf %58, %59 : vector<8x64xf32>
    %61 = math.tanh %60 : vector<8x64xf32>
    %62 = arith.truncf %61 : vector<8x64xf32> to vector<8x64xbf16>
    %cst_42 = arith.constant dense<0.000000e+00> : vector<8x16xf32>
    %63 = tpu.matmul %62, %34, %cst_42 {dimension_numbers = #tpu.dot_dimension_numbers<[1], [0], [0], [1], [0, 0, 1, 1], [], []>} : vector<8x64xbf16>, vector<64x16xbf16>, vector<8x16xf32> -> vector<8x16xf32>
    %64 = arith.addf %63, %32 : vector<8x16xf32>
    %65 = vector.extract_strided_slice %64 {offsets = [0, 0], sizes = [8, 8], strides = [1, 1]} : vector<8x16xf32> to vector<8x8xf32>
    %66 = arith.mulf %65, %65 : vector<8x8xf32>
    %cst_43 = arith.constant dense<0.000000e+00> : vector<8xf32>
    %67 = vector.multi_reduction <add>, %66, %cst_43 [1] : vector<8x8xf32> to vector<8xf32>
    %68 = vector.shape_cast %67 : vector<8xf32> to vector<8x1xf32>
    %69 = arith.addf %48, %68 : vector<8x1xf32>
    %c8_44 = arith.constant 8 : index
    %c0_45 = arith.constant 0 : index
    %70 = vector.load %arg20[%c8_44, %c0_45] : memref<56x8xf32, #tpu.memory_space<vmem>>, vector<8x8xf32>
    %71 = vector.extract_strided_slice %55 {offsets = [0, 8], sizes = [8, 8], strides = [1, 1]} : vector<8x16xf32> to vector<8x8xf32>
    %72 = arith.mulf %29, %71 : vector<8x8xf32>
    %73 = vector.extract_strided_slice %64 {offsets = [0, 8], sizes = [8, 8], strides = [1, 1]} : vector<8x16xf32> to vector<8x8xf32>
    %74 = arith.addf %73, %70 : vector<8x8xf32>
    %75 = tpu.concatenate %72, %74 in 1 : vector<8x8xf32>, vector<8x8xf32> -> vector<8x16xf32>
    %76 = arith.addf %55, %75 : vector<8x16xf32>
    %c16_46 = arith.constant 16 : index
    %c0_47 = arith.constant 0 : index
    %77 = vector.load %arg19[%c16_46, %c0_47] : memref<64x16xf32, #tpu.memory_space<vmem>>, vector<8x16xf32>
    tpu.vector_store %arg19[%c16_46, %c0_47], %76 {strides = array<i32>} : memref<64x16xf32, #tpu.memory_space<vmem>>, vector<8x16xf32>,
    %78 = arith.truncf %76 : vector<8x16xf32> to vector<8x16xbf16>
    %cst_48 = arith.constant dense<0.000000e+00> : vector<8x64xf32>
    %79 = tpu.matmul %78, %33, %cst_48 {dimension_numbers = #tpu.dot_dimension_numbers<[1], [0], [0], [1], [0, 0, 1, 1], [], []>} : vector<8x16xbf16>, vector<16x64xbf16>, vector<8x64xf32> -> vector<8x64xf32>
    %c24 = arith.constant 24 : index
    %c0_49 = arith.constant 0 : index
    %80 = vector.load %arg18[%c24, %c0_49] : memref<64x64xf32, #tpu.memory_space<vmem>>, vector<8x64xf32>
    %81 = arith.addf %79, %80 : vector<8x64xf32>
    %82 = math.tanh %81 : vector<8x64xf32>
    %83 = arith.truncf %82 : vector<8x64xf32> to vector<8x64xbf16>
    %cst_50 = arith.constant dense<0.000000e+00> : vector<8x16xf32>
    %84 = tpu.matmul %83, %34, %cst_50 {dimension_numbers = #tpu.dot_dimension_numbers<[1], [0], [0], [1], [0, 0, 1, 1], [], []>} : vector<8x64xbf16>, vector<64x16xbf16>, vector<8x16xf32> -> vector<8x16xf32>
    %85 = arith.addf %84, %32 : vector<8x16xf32>
    %86 = vector.extract_strided_slice %85 {offsets = [0, 0], sizes = [8, 8], strides = [1, 1]} : vector<8x16xf32> to vector<8x8xf32>
    %87 = arith.mulf %86, %86 : vector<8x8xf32>
    %cst_51 = arith.constant dense<0.000000e+00> : vector<8xf32>
    %88 = vector.multi_reduction <add>, %87, %cst_51 [1] : vector<8x8xf32> to vector<8xf32>
    %89 = vector.shape_cast %88 : vector<8xf32> to vector<8x1xf32>
    %90 = arith.addf %69, %89 : vector<8x1xf32>
    %c16_52 = arith.constant 16 : index
    %c0_53 = arith.constant 0 : index
    %91 = vector.load %arg20[%c16_52, %c0_53] : memref<56x8xf32, #tpu.memory_space<vmem>>, vector<8x8xf32>
    %92 = vector.extract_strided_slice %76 {offsets = [0, 8], sizes = [8, 8], strides = [1, 1]} : vector<8x16xf32> to vector<8x8xf32>
    %93 = arith.mulf %29, %92 : vector<8x8xf32>
    %94 = vector.extract_strided_slice %85 {offsets = [0, 8], sizes = [8, 8], strides = [1, 1]} : vector<8x16xf32> to vector<8x8xf32>
    %95 = arith.addf %94, %91 : vector<8x8xf32>
    %96 = tpu.concatenate %93, %95 in 1 : vector<8x8xf32>, vector<8x8xf32> -> vector<8x16xf32>
    %97 = arith.addf %76, %96 : vector<8x16xf32>
    %c24_54 = arith.constant 24 : index
    %c0_55 = arith.constant 0 : index
    %98 = vector.load %arg19[%c24_54, %c0_55] : memref<64x16xf32, #tpu.memory_space<vmem>>, vector<8x16xf32>
    tpu.vector_store %arg19[%c24_54, %c0_55], %97 {strides = array<i32>} : memref<64x16xf32, #tpu.memory_space<vmem>>, vector<8x16xf32>,
    %99 = arith.truncf %97 : vector<8x16xf32> to vector<8x16xbf16>
    %cst_56 = arith.constant dense<0.000000e+00> : vector<8x64xf32>
    %100 = tpu.matmul %99, %33, %cst_56 {dimension_numbers = #tpu.dot_dimension_numbers<[1], [0], [0], [1], [0, 0, 1, 1], [], []>} : vector<8x16xbf16>, vector<16x64xbf16>, vector<8x64xf32> -> vector<8x64xf32>
    %c32 = arith.constant 32 : index
    %c0_57 = arith.constant 0 : index
    %101 = vector.load %arg18[%c32, %c0_57] : memref<64x64xf32, #tpu.memory_space<vmem>>, vector<8x64xf32>
    %102 = arith.addf %100, %101 : vector<8x64xf32>
    %103 = math.tanh %102 : vector<8x64xf32>
    %104 = arith.truncf %103 : vector<8x64xf32> to vector<8x64xbf16>
    %cst_58 = arith.constant dense<0.000000e+00> : vector<8x16xf32>
    %105 = tpu.matmul %104, %34, %cst_58 {dimension_numbers = #tpu.dot_dimension_numbers<[1], [0], [0], [1], [0, 0, 1, 1], [], []>} : vector<8x64xbf16>, vector<64x16xbf16>, vector<8x16xf32> -> vector<8x16xf32>
    %106 = arith.addf %105, %32 : vector<8x16xf32>
    %107 = vector.extract_strided_slice %106 {offsets = [0, 0], sizes = [8, 8], strides = [1, 1]} : vector<8x16xf32> to vector<8x8xf32>
    %108 = arith.mulf %107, %107 : vector<8x8xf32>
    %cst_59 = arith.constant dense<0.000000e+00> : vector<8xf32>
    %109 = vector.multi_reduction <add>, %108, %cst_59 [1] : vector<8x8xf32> to vector<8xf32>
    %110 = vector.shape_cast %109 : vector<8xf32> to vector<8x1xf32>
    %111 = arith.addf %90, %110 : vector<8x1xf32>
    %c24_60 = arith.constant 24 : index
    %c0_61 = arith.constant 0 : index
    %112 = vector.load %arg20[%c24_60, %c0_61] : memref<56x8xf32, #tpu.memory_space<vmem>>, vector<8x8xf32>
    %113 = vector.extract_strided_slice %97 {offsets = [0, 8], sizes = [8, 8], strides = [1, 1]} : vector<8x16xf32> to vector<8x8xf32>
    %114 = arith.mulf %29, %113 : vector<8x8xf32>
    %115 = vector.extract_strided_slice %106 {offsets = [0, 8], sizes = [8, 8], strides = [1, 1]} : vector<8x16xf32> to vector<8x8xf32>
    %116 = arith.addf %115, %112 : vector<8x8xf32>
    %117 = tpu.concatenate %114, %116 in 1 : vector<8x8xf32>, vector<8x8xf32> -> vector<8x16xf32>
    %118 = arith.addf %97, %117 : vector<8x16xf32>
    %c32_62 = arith.constant 32 : index
    %c0_63 = arith.constant 0 : index
    %119 = vector.load %arg19[%c32_62, %c0_63] : memref<64x16xf32, #tpu.memory_space<vmem>>, vector<8x16xf32>
    tpu.vector_store %arg19[%c32_62, %c0_63], %118 {strides = array<i32>} : memref<64x16xf32, #tpu.memory_space<vmem>>, vector<8x16xf32>,
    %120 = arith.truncf %118 : vector<8x16xf32> to vector<8x16xbf16>
    %cst_64 = arith.constant dense<0.000000e+00> : vector<8x64xf32>
    %121 = tpu.matmul %120, %33, %cst_64 {dimension_numbers = #tpu.dot_dimension_numbers<[1], [0], [0], [1], [0, 0, 1, 1], [], []>} : vector<8x16xbf16>, vector<16x64xbf16>, vector<8x64xf32> -> vector<8x64xf32>
    %c40 = arith.constant 40 : index
    %c0_65 = arith.constant 0 : index
    %122 = vector.load %arg18[%c40, %c0_65] : memref<64x64xf32, #tpu.memory_space<vmem>>, vector<8x64xf32>
    %123 = arith.addf %121, %122 : vector<8x64xf32>
    %124 = math.tanh %123 : vector<8x64xf32>
    %125 = arith.truncf %124 : vector<8x64xf32> to vector<8x64xbf16>
    %cst_66 = arith.constant dense<0.000000e+00> : vector<8x16xf32>
    %126 = tpu.matmul %125, %34, %cst_66 {dimension_numbers = #tpu.dot_dimension_numbers<[1], [0], [0], [1], [0, 0, 1, 1], [], []>} : vector<8x64xbf16>, vector<64x16xbf16>, vector<8x16xf32> -> vector<8x16xf32>
    %127 = arith.addf %126, %32 : vector<8x16xf32>
    %128 = vector.extract_strided_slice %127 {offsets = [0, 0], sizes = [8, 8], strides = [1, 1]} : vector<8x16xf32> to vector<8x8xf32>
    %129 = arith.mulf %128, %128 : vector<8x8xf32>
    %cst_67 = arith.constant dense<0.000000e+00> : vector<8xf32>
    %130 = vector.multi_reduction <add>, %129, %cst_67 [1] : vector<8x8xf32> to vector<8xf32>
    %131 = vector.shape_cast %130 : vector<8xf32> to vector<8x1xf32>
    %132 = arith.addf %111, %131 : vector<8x1xf32>
    %c32_68 = arith.constant 32 : index
    %c0_69 = arith.constant 0 : index
    %133 = vector.load %arg20[%c32_68, %c0_69] : memref<56x8xf32, #tpu.memory_space<vmem>>, vector<8x8xf32>
    %134 = vector.extract_strided_slice %118 {offsets = [0, 8], sizes = [8, 8], strides = [1, 1]} : vector<8x16xf32> to vector<8x8xf32>
    %135 = arith.mulf %29, %134 : vector<8x8xf32>
    %136 = vector.extract_strided_slice %127 {offsets = [0, 8], sizes = [8, 8], strides = [1, 1]} : vector<8x16xf32> to vector<8x8xf32>
    %137 = arith.addf %136, %133 : vector<8x8xf32>
    %138 = tpu.concatenate %135, %137 in 1 : vector<8x8xf32>, vector<8x8xf32> -> vector<8x16xf32>
    %139 = arith.addf %118, %138 : vector<8x16xf32>
    %c40_70 = arith.constant 40 : index
    %c0_71 = arith.constant 0 : index
    %140 = vector.load %arg19[%c40_70, %c0_71] : memref<64x16xf32, #tpu.memory_space<vmem>>, vector<8x16xf32>
    tpu.vector_store %arg19[%c40_70, %c0_71], %139 {strides = array<i32>} : memref<64x16xf32, #tpu.memory_space<vmem>>, vector<8x16xf32>,
    %141 = arith.truncf %139 : vector<8x16xf32> to vector<8x16xbf16>
    %cst_72 = arith.constant dense<0.000000e+00> : vector<8x64xf32>
    %142 = tpu.matmul %141, %33, %cst_72 {dimension_numbers = #tpu.dot_dimension_numbers<[1], [0], [0], [1], [0, 0, 1, 1], [], []>} : vector<8x16xbf16>, vector<16x64xbf16>, vector<8x64xf32> -> vector<8x64xf32>
    %c48 = arith.constant 48 : index
    %c0_73 = arith.constant 0 : index
    %143 = vector.load %arg18[%c48, %c0_73] : memref<64x64xf32, #tpu.memory_space<vmem>>, vector<8x64xf32>
    %144 = arith.addf %142, %143 : vector<8x64xf32>
    %145 = math.tanh %144 : vector<8x64xf32>
    %146 = arith.truncf %145 : vector<8x64xf32> to vector<8x64xbf16>
    %cst_74 = arith.constant dense<0.000000e+00> : vector<8x16xf32>
    %147 = tpu.matmul %146, %34, %cst_74 {dimension_numbers = #tpu.dot_dimension_numbers<[1], [0], [0], [1], [0, 0, 1, 1], [], []>} : vector<8x64xbf16>, vector<64x16xbf16>, vector<8x16xf32> -> vector<8x16xf32>
    %148 = arith.addf %147, %32 : vector<8x16xf32>
    %149 = vector.extract_strided_slice %148 {offsets = [0, 0], sizes = [8, 8], strides = [1, 1]} : vector<8x16xf32> to vector<8x8xf32>
    %150 = arith.mulf %149, %149 : vector<8x8xf32>
    %cst_75 = arith.constant dense<0.000000e+00> : vector<8xf32>
    %151 = vector.multi_reduction <add>, %150, %cst_75 [1] : vector<8x8xf32> to vector<8xf32>
    %152 = vector.shape_cast %151 : vector<8xf32> to vector<8x1xf32>
    %153 = arith.addf %132, %152 : vector<8x1xf32>
    %c40_76 = arith.constant 40 : index
    %c0_77 = arith.constant 0 : index
    %154 = vector.load %arg20[%c40_76, %c0_77] : memref<56x8xf32, #tpu.memory_space<vmem>>, vector<8x8xf32>
    %155 = vector.extract_strided_slice %139 {offsets = [0, 8], sizes = [8, 8], strides = [1, 1]} : vector<8x16xf32> to vector<8x8xf32>
    %156 = arith.mulf %29, %155 : vector<8x8xf32>
    %157 = vector.extract_strided_slice %148 {offsets = [0, 8], sizes = [8, 8], strides = [1, 1]} : vector<8x16xf32> to vector<8x8xf32>
    %158 = arith.addf %157, %154 : vector<8x8xf32>
    %159 = tpu.concatenate %156, %158 in 1 : vector<8x8xf32>, vector<8x8xf32> -> vector<8x16xf32>
    %160 = arith.addf %139, %159 : vector<8x16xf32>
    %c48_78 = arith.constant 48 : index
    %c0_79 = arith.constant 0 : index
    %161 = vector.load %arg19[%c48_78, %c0_79] : memref<64x16xf32, #tpu.memory_space<vmem>>, vector<8x16xf32>
    tpu.vector_store %arg19[%c48_78, %c0_79], %160 {strides = array<i32>} : memref<64x16xf32, #tpu.memory_space<vmem>>, vector<8x16xf32>,
    %162 = arith.truncf %160 : vector<8x16xf32> to vector<8x16xbf16>
    %cst_80 = arith.constant dense<0.000000e+00> : vector<8x64xf32>
    %163 = tpu.matmul %162, %33, %cst_80 {dimension_numbers = #tpu.dot_dimension_numbers<[1], [0], [0], [1], [0, 0, 1, 1], [], []>} : vector<8x16xbf16>, vector<16x64xbf16>, vector<8x64xf32> -> vector<8x64xf32>
    %c56 = arith.constant 56 : index
    %c0_81 = arith.constant 0 : index
    %164 = vector.load %arg18[%c56, %c0_81] : memref<64x64xf32, #tpu.memory_space<vmem>>, vector<8x64xf32>
    %165 = arith.addf %163, %164 : vector<8x64xf32>
    %166 = math.tanh %165 : vector<8x64xf32>
    %167 = arith.truncf %166 : vector<8x64xf32> to vector<8x64xbf16>
    %cst_82 = arith.constant dense<0.000000e+00> : vector<8x16xf32>
    %168 = tpu.matmul %167, %34, %cst_82 {dimension_numbers = #tpu.dot_dimension_numbers<[1], [0], [0], [1], [0, 0, 1, 1], [], []>} : vector<8x64xbf16>, vector<64x16xbf16>, vector<8x16xf32> -> vector<8x16xf32>
    %169 = arith.addf %168, %32 : vector<8x16xf32>
    %170 = vector.extract_strided_slice %169 {offsets = [0, 0], sizes = [8, 8], strides = [1, 1]} : vector<8x16xf32> to vector<8x8xf32>
    %171 = arith.mulf %170, %170 : vector<8x8xf32>
    %cst_83 = arith.constant dense<0.000000e+00> : vector<8xf32>
    %172 = vector.multi_reduction <add>, %171, %cst_83 [1] : vector<8x8xf32> to vector<8xf32>
    %173 = vector.shape_cast %172 : vector<8xf32> to vector<8x1xf32>
    %174 = arith.addf %153, %173 : vector<8x1xf32>
    %c48_84 = arith.constant 48 : index
    %c0_85 = arith.constant 0 : index
    %175 = vector.load %arg20[%c48_84, %c0_85] : memref<56x8xf32, #tpu.memory_space<vmem>>, vector<8x8xf32>
    %176 = vector.extract_strided_slice %160 {offsets = [0, 8], sizes = [8, 8], strides = [1, 1]} : vector<8x16xf32> to vector<8x8xf32>
    %177 = arith.mulf %29, %176 : vector<8x8xf32>
    %178 = vector.extract_strided_slice %169 {offsets = [0, 8], sizes = [8, 8], strides = [1, 1]} : vector<8x16xf32> to vector<8x8xf32>
    %179 = arith.addf %178, %175 : vector<8x8xf32>
    %180 = tpu.concatenate %177, %179 in 1 : vector<8x8xf32>, vector<8x8xf32> -> vector<8x16xf32>
    %181 = arith.addf %160, %180 : vector<8x16xf32>
    %c56_86 = arith.constant 56 : index
    %c0_87 = arith.constant 0 : index
    %182 = vector.load %arg19[%c56_86, %c0_87] : memref<64x16xf32, #tpu.memory_space<vmem>>, vector<8x16xf32>
    tpu.vector_store %arg19[%c56_86, %c0_87], %181 {strides = array<i32>} : memref<64x16xf32, #tpu.memory_space<vmem>>, vector<8x16xf32>,
    %c0_88 = arith.constant 0 : index
    %c0_89 = arith.constant 0 : index
    %183 = vector.load %arg19[%c0_88, %c0_89] : memref<64x16xf32, #tpu.memory_space<vmem>>, vector<64x16xf32>
    %c0_90 = arith.constant 0 : index
    %c0_91 = arith.constant 0 : index
    %184 = vector.load %arg10[%c0_90, %c0_91] : memref<16x4xf32, #tpu.memory_space<vmem>>, vector<16x4xf32>
    %cst_92 = arith.constant dense<0.000000e+00> : vector<64x4xf32>
    %185 = tpu.matmul %183, %184, %cst_92 {dimension_numbers = #tpu.dot_dimension_numbers<[1], [0], [0], [1], [0, 0, 1, 1], [], []>} : vector<64x16xf32>, vector<16x4xf32>, vector<64x4xf32> -> vector<64x4xf32>
    %c0_93 = arith.constant 0 : index
    %c0_94 = arith.constant 0 : index
    %186 = vector.load %arg11[%c0_93, %c0_94] : memref<1x4xf32, #tpu.memory_space<vmem>>, vector<1x4xf32>
    %187 = vector.broadcast %186 : vector<1x4xf32> to vector<64x4xf32>
    %188 = arith.addf %185, %187 : vector<64x4xf32>
    %189 = arith.subf %0, %188 : vector<64x4xf32>
    %190 = arith.mulf %189, %189 : vector<64x4xf32>
    %cst_95 = arith.constant 0.000000e+00 : f32
    %191 = vector.broadcast %cst_95 : f32 to vector<64x4xf32>
    %192 = arith.subf %191, %190 : vector<64x4xf32>
    %cst_96 = arith.constant 5.000000e+01 : f32
    %193 = vector.broadcast %cst_96 : f32 to vector<64x4xf32>
    %194 = arith.mulf %192, %193 : vector<64x4xf32>
    %cst_97 = arith.constant -1.38364661 : f32
    %195 = vector.broadcast %cst_97 : f32 to vector<64x4xf32>
    %196 = arith.subf %194, %195 : vector<64x4xf32>
    %cst_98 = arith.constant dense<0.000000e+00> : vector<64xf32>
    %197 = vector.multi_reduction <add>, %196, %cst_98 [1] : vector<64x4xf32> to vector<64xf32>
    %198 = vector.shape_cast %197 : vector<64xf32> to vector<64x1xf32>
    %cst_99 = arith.constant dense<0.000000e+00> : vector<1xf32>
    %199 = vector.multi_reduction <add>, %198, %cst_99 [0] : vector<64x1xf32> to vector<1xf32>
    %200 = vector.shape_cast %199 : vector<1xf32> to vector<1x1xf32>
    %cst_100 = arith.constant 8.000000e+00 : f32
    %201 = vector.broadcast %cst_100 : f32 to vector<1x1xf32>
    %202 = arith.divf %200, %201 : vector<1x1xf32>
    %cst_101 = arith.constant 0.000000e+00 : f32
    %203 = vector.broadcast %cst_101 : f32 to vector<1x1xf32>
    %204 = arith.subf %203, %202 : vector<1x1xf32>
    %c0_102 = arith.constant 0 : index
    %c0_103 = arith.constant 0 : index
    %205 = vector.load %arg16[%c0_102, %c0_103] : memref<1x1xf32, #tpu.memory_space<vmem>>, vector<1x1xf32>
    tpu.vector_store %arg16[%c0_102, %c0_103], %204 {strides = array<i32>} : memref<1x1xf32, #tpu.memory_space<vmem>>, vector<1x1xf32>,
    %c0_104 = arith.constant 0 : index
    %c0_105 = arith.constant 0 : index
    %206 = vector.load %arg14[%c0_104, %c0_105] : memref<1x16xf32, #tpu.memory_space<vmem>>, vector<1x16xf32>
    %c0_106 = arith.constant 0 : index
    %c0_107 = arith.constant 0 : index
    %207 = vector.load %arg15[%c0_106, %c0_107] : memref<1x16xf32, #tpu.memory_space<vmem>>, vector<1x16xf32>
    %cst_108 = arith.constant 2.000000e+00 : f32
    %208 = vector.broadcast %cst_108 : f32 to vector<8x16xf32>
    %209 = arith.mulf %208, %19 : vector<8x16xf32>
    %210 = math.exp %209 : vector<8x16xf32>
    %cst_109 = arith.constant 2.000000e+00 : f32
    %211 = vector.broadcast %cst_109 : f32 to vector<1x16xf32>
    %212 = arith.mulf %211, %207 : vector<1x16xf32>
    %213 = math.exp %212 : vector<1x16xf32>
    %214 = vector.broadcast %207 : vector<1x16xf32> to vector<8x16xf32>
    %215 = arith.subf %214, %19 : vector<8x16xf32>
    %216 = vector.broadcast %206 : vector<1x16xf32> to vector<8x16xf32>
    %217 = arith.subf %18, %216 : vector<8x16xf32>
    %218 = arith.mulf %217, %217 : vector<8x16xf32>
    %219 = arith.addf %210, %218 : vector<8x16xf32>
    %cst_110 = arith.constant 2.000000e+00 : f32
    %220 = vector.broadcast %cst_110 : f32 to vector<1x16xf32>
    %221 = arith.mulf %220, %213 : vector<1x16xf32>
    %222 = vector.broadcast %221 : vector<1x16xf32> to vector<8x16xf32>
    %223 = arith.divf %219, %222 : vector<8x16xf32>
    %224 = arith.addf %215, %223 : vector<8x16xf32>
    %cst_111 = arith.constant 5.000000e-01 : f32
    %225 = vector.broadcast %cst_111 : f32 to vector<8x16xf32>
    %226 = arith.subf %224, %225 : vector<8x16xf32>
    %cst_112 = arith.constant dense<0.000000e+00> : vector<8xf32>
    %227 = vector.multi_reduction <add>, %226, %cst_112 [1] : vector<8x16xf32> to vector<8xf32>
    %228 = vector.shape_cast %227 : vector<8xf32> to vector<8x1xf32>
    %cst_113 = arith.constant dense<0.000000e+00> : vector<1xf32>
    %229 = vector.multi_reduction <add>, %228, %cst_113 [0] : vector<8x1xf32> to vector<1xf32>
    %230 = vector.shape_cast %229 : vector<1xf32> to vector<1x1xf32>
    %cst_114 = arith.constant 8.000000e+00 : f32
    %231 = vector.broadcast %cst_114 : f32 to vector<1x1xf32>
    %232 = arith.divf %230, %231 : vector<1x1xf32>
    %cst_115 = arith.constant dense<0.000000e+00> : vector<1xf32>
    %233 = vector.multi_reduction <add>, %174, %cst_115 [0] : vector<8x1xf32> to vector<1xf32>
    %234 = vector.shape_cast %233 : vector<1xf32> to vector<1x1xf32>
    %cst_116 = arith.constant 8.000000e+00 : f32
    %235 = vector.broadcast %cst_116 : f32 to vector<1x1xf32>
    %236 = arith.divf %234, %235 : vector<1x1xf32>
    %237 = arith.addf %236, %232 : vector<1x1xf32>
    %c0_117 = arith.constant 0 : index
    %c0_118 = arith.constant 0 : index
    %238 = vector.load %arg17[%c0_117, %c0_118] : memref<1x1xf32, #tpu.memory_space<vmem>>, vector<1x1xf32>
    tpu.vector_store %arg17[%c0_117, %c0_118], %237 {strides = array<i32>} : memref<1x1xf32, #tpu.memory_space<vmem>>, vector<1x1xf32>,
    return
  }
}

</mosaic_0001>

<llo_original>
// kernel: tpu_custom_call.1
$region0: #{tpu_custom_call.1}
  #allocation0 [shape = 'u32[]', space=smem, size = 0x4, offset = 0x4, fixed_abs, tag = 'smem constant byte address 0x4 - core index']
  #allocation1 [shape = 'u32[144,128]{1,0:T(1,128)}', space=vmem, size = 0x12000, scoped, tag = 'internal scratch']
  #allocation2 [shape = 'f32[64,64]{1,0:T(8,128)}', space=vmem, size = 0x8000, scoped, tag = 'scratch operand']
  #allocation3 [shape = 'f32[64,16]{1,0:T(8,128)}', space=vmem, size = 0x8000, scoped, tag = 'scratch operand']
  #allocation4 [shape = 'f32[56,8]{1,0:T(8,128)}', space=vmem, size = 0x7000, scoped, tag = 'scratch operand']
  %s0 = inlined_call_operand.vmem [shape: f32[64,4], index: 0, kind: input, shape index: {}]
  %s1 = inlined_call_operand.vmem [shape: f32[8,16], index: 1, kind: input, shape index: {}]
  %s2 = inlined_call_operand.vmem [shape: f32[56,8], index: 2, kind: input, shape index: {}]
  %s3 = inlined_call_operand.vmem [shape: f32[4,32], index: 3, kind: input, shape index: {}]
  %s4 = inlined_call_operand.vmem [shape: f32[1,32], index: 4, kind: input, shape index: {}]
  %s5 = inlined_call_operand.vmem [shape: f32[4,64], index: 5, kind: input, shape index: {}]
  %s6 = inlined_call_operand.vmem [shape: f32[1,64], index: 6, kind: input, shape index: {}]
  %s7 = inlined_call_operand.vmem [shape: bf16[16,64], index: 7, kind: input, shape index: {}]
  %s8 = inlined_call_operand.vmem [shape: bf16[64,16], index: 8, kind: input, shape index: {}]
  %s9 = inlined_call_operand.vmem [shape: f32[1,16], index: 9, kind: input, shape index: {}]
  %s10 = inlined_call_operand.vmem [shape: f32[16,4], index: 10, kind: input, shape index: {}]
  %s11 = inlined_call_operand.vmem [shape: f32[1,4], index: 11, kind: input, shape index: {}]
  %s12 = inlined_call_operand.vmem [shape: f32[1,8], index: 12, kind: input, shape index: {}]
  %s13 = inlined_call_operand.vmem [shape: f32[1,8], index: 13, kind: input, shape index: {}]
  %s14 = inlined_call_operand.vmem [shape: f32[1,16], index: 14, kind: input, shape index: {}]
  %s15 = inlined_call_operand.vmem [shape: f32[1,16], index: 15, kind: input, shape index: {}]
  %s16 = inlined_call_operand.hbm [shape: f32[1,1], index: 16, kind: output, shape index: {0}]
  %s17 = inlined_call_operand.hbm [shape: f32[1,1], index: 17, kind: output, shape index: {1}]
  %18 = xla_tuple %s16, %s17
  %s19 = sld [smem:[#allocation0]]
  $region82: #{tpu_custom_call.1} parent=0
    _
  %s21 = ssub.s32 1, %s19
  %s22 = scalar_select 0, %s21, %s19
  $region1: #{tpu_custom_call.1} parent=0
    #allocation5 [shape = 'u8[512]{0}', space=vmem, size = 0x400, scoped, tag = 'output window, operand 0, single buffered']
    #allocation6 [shape = 's32[1]{0}', space=sflag, size = 0x4, scoped, tag = 'scoped memory for tpu_custom_call.1']
    #allocation7 [shape = 'u8[512]{0}', space=vmem, size = 0x400, scoped, tag = 'output window, operand 1, single buffered']
    #allocation8 [shape = 's32[1]{0}', space=sflag, size = 0x4, scoped, tag = 'scoped memory for tpu_custom_call.1']
    %23 = vsyncpa [#allocation6], 0
    %24 = vsyncpa [#allocation8], 0
    // Predicated region
    $region2: #{tpu_custom_call.1} parent=1 // pred_check
      _
    $region3: #{tpu_custom_call.1} parent=1 // pred_check_branch
      %26 = sbr.rel (0) target = $region5
    $region4: #{tpu_custom_call.1} parent=1 // pred_region
      _
    $region5: #{tpu_custom_call.1} parent=1 // pred_fallthru
      _
    // Predicated region
    $region6: #{tpu_custom_call.1} parent=1 // pred_check
      _
    $region7: #{tpu_custom_call.1} parent=1 // pred_check_branch
      %28 = sbr.rel (0) target = $region9
    $region8: #{tpu_custom_call.1} parent=1 // pred_region
      _
    $region9: #{tpu_custom_call.1} parent=1 // pred_fallthru
      _
    // Predicated region
    $region10: #{tpu_custom_call.1} parent=1 // pred_check
      _
    $region11: #{tpu_custom_call.1} parent=1 // pred_check_branch
      %30 = sbr.rel (0) target = $region13
    $region12: #{tpu_custom_call.1} parent=1 // pred_region
      _
    $region13: #{tpu_custom_call.1} parent=1 // pred_fallthru
      _
    // Predicated region
    $region14: #{tpu_custom_call.1} parent=1 // pred_check
      _
    $region15: #{tpu_custom_call.1} parent=1 // pred_check_branch
      %32 = sbr.rel (0) target = $region17
    $region16: #{tpu_custom_call.1} parent=1 // pred_region
      _
    $region17: #{tpu_custom_call.1} parent=1 // pred_fallthru
      _
    // Predicated region
    $region18: #{tpu_custom_call.1} parent=1 // pred_check
      _
    $region19: #{tpu_custom_call.1} parent=1 // pred_check_branch
      %34 = sbr.rel (0) target = $region21
    $region20: #{tpu_custom_call.1} parent=1 // pred_region
      _
    $region21: #{tpu_custom_call.1} parent=1 // pred_fallthru
      _
    // Predicated region
    $region22: #{tpu_custom_call.1} parent=1 // pred_check
      _
    $region23: #{tpu_custom_call.1} parent=1 // pred_check_branch
      %36 = sbr.rel (0) target = $region25
    $region24: #{tpu_custom_call.1} parent=1 // pred_region
      _
    $region25: #{tpu_custom_call.1} parent=1 // pred_fallthru
      _
    // Predicated region
    $region26: #{tpu_custom_call.1} parent=1 // pred_check
      _
    $region27: #{tpu_custom_call.1} parent=1 // pred_check_branch
      %38 = sbr.rel (0) target = $region29
    $region28: #{tpu_custom_call.1} parent=1 // pred_region
      _
    $region29: #{tpu_custom_call.1} parent=1 // pred_fallthru
      _
    // Predicated region
    $region30: #{tpu_custom_call.1} parent=1 // pred_check
      _
    $region31: #{tpu_custom_call.1} parent=1 // pred_check_branch
      %40 = sbr.rel (0) target = $region33
    $region32: #{tpu_custom_call.1} parent=1 // pred_region
      _
    $region33: #{tpu_custom_call.1} parent=1 // pred_fallthru
      _
    // Predicated region
    $region34: #{tpu_custom_call.1} parent=1 // pred_check
      _
    $region35: #{tpu_custom_call.1} parent=1 // pred_check_branch
      %42 = sbr.rel (0) target = $region37
    $region36: #{tpu_custom_call.1} parent=1 // pred_region
      _
    $region37: #{tpu_custom_call.1} parent=1 // pred_fallthru
      _
    // Predicated region
    $region38: #{tpu_custom_call.1} parent=1 // pred_check
      _
    $region39: #{tpu_custom_call.1} parent=1 // pred_check_branch
      %44 = sbr.rel (0) target = $region41
    $region40: #{tpu_custom_call.1} parent=1 // pred_region
      _
    $region41: #{tpu_custom_call.1} parent=1 // pred_fallthru
      _
    // Predicated region
    $region42: #{tpu_custom_call.1} parent=1 // pred_check
      _
    $region43: #{tpu_custom_call.1} parent=1 // pred_check_branch
      %46 = sbr.rel (0) target = $region45
    $region44: #{tpu_custom_call.1} parent=1 // pred_region
      _
    $region45: #{tpu_custom_call.1} parent=1 // pred_fallthru
      _
    // Predicated region
    $region46: #{tpu_custom_call.1} parent=1 // pred_check
      _
    $region47: #{tpu_custom_call.1} parent=1 // pred_check_branch
      %48 = sbr.rel (0) target = $region49
    $region48: #{tpu_custom_call.1} parent=1 // pred_region
      _
    $region49: #{tpu_custom_call.1} parent=1 // pred_fallthru
      _
    // Predicated region
    $region50: #{tpu_custom_call.1} parent=1 // pred_check
      _
    $region51: #{tpu_custom_call.1} parent=1 // pred_check_branch
      %50 = sbr.rel (0) target = $region53
    $region52: #{tpu_custom_call.1} parent=1 // pred_region
      _
    $region53: #{tpu_custom_call.1} parent=1 // pred_fallthru
      _
    // Predicated region
    $region54: #{tpu_custom_call.1} parent=1 // pred_check
      _
    $region55: #{tpu_custom_call.1} parent=1 // pred_check_branch
      %52 = sbr.rel (0) target = $region57
    $region56: #{tpu_custom_call.1} parent=1 // pred_region
      _
    $region57: #{tpu_custom_call.1} parent=1 // pred_fallthru
      _
    // Predicated region
    $region58: #{tpu_custom_call.1} parent=1 // pred_check
      _
    $region59: #{tpu_custom_call.1} parent=1 // pred_check_branch
      %54 = sbr.rel (0) target = $region61
    $region60: #{tpu_custom_call.1} parent=1 // pred_region
      _
    $region61: #{tpu_custom_call.1} parent=1 // pred_fallthru
      _
    // Predicated region
    $region62: #{tpu_custom_call.1} parent=1 // pred_check
      _
    $region63: #{tpu_custom_call.1} parent=1 // pred_check_branch
      %56 = sbr.rel (0) target = $region65
    $region64: #{tpu_custom_call.1} parent=1 // pred_region
      _
    $region65: #{tpu_custom_call.1} parent=1 // pred_fallthru
      _
    %v58 = vld [vmem:[%s0] sm:$0xff]
    %v59 = vld [vmem:[%s0 + $0x8] sm:$0xff]
    %v60 = vld [vmem:[%s0 + $0x10] sm:$0xff]
    %v61 = vld [vmem:[%s0 + $0x18] sm:$0xff]
    %v62 = vld [vmem:[%s0 + $0x20] sm:$0xff]
    %v63 = vld [vmem:[%s0 + $0x28] sm:$0xff]
    %v64 = vld [vmem:[%s0 + $0x30] sm:$0xff]
    %v65 = vld [vmem:[%s0 + $0x38] sm:$0xff]
    %v66 = vld [vmem:[%s5] sm:$0xf]
    %v67 = vld [vmem:[%s6] sm:$0x1]
    %v69 = vlaneseq
    %v70 = vshrl.u32 %v69, 7
    %v71 = vsub.s32 0, %v70
    %v72 = vrot.slane %v67, %v71
    %vm74 = vcmask 31744
    %v76 = vsel %vm74, %v58, 0
    %v79 = vsel %vm74, %v59, 0
    %v82 = vsel %vm74, %v60, 0
    %v85 = vsel %vm74, %v61, 0
    %v88 = vsel %vm74, %v62, 0
    %v91 = vsel %vm74, %v63, 0
    %v94 = vsel %vm74, %v64, 0
    %v97 = vsel %vm74, %v65, 0
    %vm99 = vcmask 1043456
    %v101 = vsel %vm99, %v66, 0
    %103 = vmatprep.subr.mxu0 0.0
    %104 = vmatpush1.msra.mxu0 %v101
    %105 = vmatprep.subr.mxu0 0.0
    %106 = vmatpush1.msra.mxu0 0.0
    %107 = vmatprep.subr.mxu0 0.0
    %108 = vmatpush1.msra.mxu0 0.0
    %109 = vmatprep.subr.mxu0 0.0
    %110 = vmatpush1.msra.mxu0 0.0
    %111 = vmatprep.subr.mxu0 0.0
    %112 = vmatpush1.msra.mxu0 0.0
    %113 = vmatprep.subr.mxu0 0.0
    %114 = vmatpush1.msra.mxu0 0.0
    %115 = vmatprep.subr.mxu0 0.0
    %116 = vmatpush1.msra.mxu0 0.0
    %117 = vmatprep.subr.mxu0 0.0
    %118 = vmatpush1.msra.mxu0 0.0
    %119 = vmatprep.subr.mxu0 0.0
    %120 = vmatpush1.msra.mxu0 0.0
    %121 = vmatprep.subr.mxu0 0.0
    %122 = vmatpush1.msra.mxu0 0.0
    %123 = vmatprep.subr.mxu0 0.0
    %124 = vmatpush1.msra.mxu0 0.0
    %125 = vmatprep.subr.mxu0 0.0
    %126 = vmatpush1.msra.mxu0 0.0
    %127 = vmatprep.subr.mxu0 0.0
    %128 = vmatpush1.msra.mxu0 0.0
    %129 = vmatprep.subr.mxu0 0.0
    %130 = vmatpush1.msra.mxu0 0.0
    %131 = vmatprep.subr.mxu0 0.0
    %132 = vmatpush1.msra.mxu0 0.0
    %133 = vmatprep.subr.mxu0 0.0
    %134 = vmatpush1.msra.mxu0 0.0
    %135 = vmatprep.subr.mxu0 0.0
    %136 = vmatpush1.msra.mxu0 0.0
    %137 = vmatprep.subr.mxu0 0.0
    %138 = vmatpush1.msra.mxu0 0.0
    %139 = vmatprep.subr.mxu0 0.0
    %140 = vmatpush1.msra.mxu0 0.0
    %141 = vmatprep.subr.mxu0 0.0
    %142 = vmatpush1.msra.mxu0 0.0
    %143 = vmatprep.subr.mxu0 0.0
    %144 = vmatpush1.msra.mxu0 0.0
    %145 = vmatprep.subr.mxu0 0.0
    %146 = vmatpush1.msra.mxu0 0.0
    %147 = vmatprep.subr.mxu0 0.0
    %148 = vmatpush1.msra.mxu0 0.0
    %149 = vmatprep.subr.mxu0 0.0
    %150 = vmatpush1.msra.mxu0 0.0
    %151 = vmatprep.subr.mxu0 0.0
    %152 = vmatpush1.msra.mxu0 0.0
    %153 = vmatprep.subr.mxu0 0.0
    %154 = vmatpush1.msra.mxu0 0.0
    %155 = vmatprep.subr.mxu0 0.0
    %156 = vmatpush1.msra.mxu0 0.0
    %157 = vmatprep.subr.mxu0 0.0
    %158 = vmatpush1.msra.mxu0 0.0
    %159 = vmatprep.subr.mxu0 0.0
    %160 = vmatpush1.msra.mxu0 0.0
    %161 = vmatprep.subr.mxu0 0.0
    %162 = vmatpush1.msra.mxu0 0.0
    %163 = vmatprep.subr.mxu0 0.0
    %164 = vmatpush1.msra.mxu0 0.0
    %165 = vmatprep.subr.mxu0 0.0
    %166 = vmatpush1.msra.mxu0 0.0
    %167 = vmatprep.mubr.f32.mxu0 0.0
    %168 = vmatmul.mubr.f32.gmra.mrb[0].mxu0 %v76
    %v169 = vpop.f32.mrb[0].mxu0
    %v170 = vadd.f32 %v72, %v169
    %v171 = vpop.f32.mrb[0].mxu0
    %172 = vmatprep.mubr.f32.mxu0 0.0
    %173 = vmatmul.mubr.f32.gmra.mrb[0].mxu0 %v79
    %v174 = vpop.f32.mrb[0].mxu0
    %v175 = vadd.f32 %v72, %v174
    %v176 = vpop.f32.mrb[0].mxu0
    %177 = vmatprep.mubr.f32.mxu0 0.0
    %178 = vmatmul.mubr.f32.gmra.mrb[0].mxu0 %v82
    %v179 = vpop.f32.mrb[0].mxu0
    %v180 = vadd.f32 %v72, %v179
    %v181 = vpop.f32.mrb[0].mxu0
    %182 = vmatprep.mubr.f32.mxu0 0.0
    %183 = vmatmul.mubr.f32.gmra.mrb[0].mxu0 %v85
    %v184 = vpop.f32.mrb[0].mxu0
    %v185 = vadd.f32 %v72, %v184
    %v186 = vpop.f32.mrb[0].mxu0
    %187 = vmatprep.mubr.f32.mxu0 0.0
    %188 = vmatmul.mubr.f32.gmra.mrb[0].mxu0 %v88
    %v189 = vpop.f32.mrb[0].mxu0
    %v190 = vadd.f32 %v72, %v189
    %v191 = vpop.f32.mrb[0].mxu0
    %192 = vmatprep.mubr.f32.mxu0 0.0
    %193 = vmatmul.mubr.f32.gmra.mrb[0].mxu0 %v91
    %v194 = vpop.f32.mrb[0].mxu0
    %v195 = vadd.f32 %v72, %v194
    %v196 = vpop.f32.mrb[0].mxu0
    %197 = vmatprep.mubr.f32.mxu0 0.0
    %198 = vmatmul.mubr.f32.gmra.mrb[0].mxu0 %v94
    %v199 = vpop.f32.mrb[0].mxu0
    %v200 = vadd.f32 %v72, %v199
    %v201 = vpop.f32.mrb[0].mxu0
    %202 = vmatprep.mubr.f32.mxu0 0.0
    %203 = vmatmul.mubr.f32.gmra.mrb[0].mxu0 %v97
    %v204 = vpop.f32.mrb[0].mxu0
    %v205 = vadd.f32 %v72, %v204
    %v206 = vpop.f32.mrb[0].mxu0
    %207 = vdwg.mxu0
    %vm208 = vcmask 523264
    %209 = vst.msk [vmem:[#allocation2] sm:$0xff] %vm208, %v170
    %210 = vst.msk [vmem:[#allocation2 + $0x8] sm:$0xff] %vm208, %v175
    %211 = vst.msk [vmem:[#allocation2 + $0x10] sm:$0xff] %vm208, %v180
    %212 = vst.msk [vmem:[#allocation2 + $0x18] sm:$0xff] %vm208, %v185
    %213 = vst.msk [vmem:[#allocation2 + $0x20] sm:$0xff] %vm208, %v190
    %214 = vst.msk [vmem:[#allocation2 + $0x28] sm:$0xff] %vm208, %v195
    %215 = vst.msk [vmem:[#allocation2 + $0x30] sm:$0xff] %vm208, %v200
    %216 = vst.msk [vmem:[#allocation2 + $0x38] sm:$0xff] %vm208, %v205
    %v217 = vld [vmem:[%s2] sm:$0xff]
    %v218 = vld [vmem:[%s2 + $0x8] sm:$0xff]
    %v219 = vld [vmem:[%s2 + $0x10] sm:$0xff]
    %v220 = vld [vmem:[%s2 + $0x18] sm:$0xff]
    %v221 = vld [vmem:[%s2 + $0x20] sm:$0xff]
    %v222 = vld [vmem:[%s2 + $0x28] sm:$0xff]
    %v223 = vld [vmem:[%s2 + $0x30] sm:$0xff]
    %v224 = vld [vmem:[%s13] sm:$0x1]
    %v226 = vlaneseq
    %v227 = vshrl.u32 %v226, 7
    %v228 = vsub.s32 0, %v227
    %v229 = vrot.slane %v224, %v228
    %v231 = vmul.f32 %v217, %v229
    %v232 = vmul.f32 %v218, %v229
    %v233 = vmul.f32 %v219, %v229
    %v234 = vmul.f32 %v220, %v229
    %v235 = vmul.f32 %v221, %v229
    %v236 = vmul.f32 %v222, %v229
    %v237 = vmul.f32 %v223, %v229
    %vm238 = vcmask 64512
    %239 = vst.msk [vmem:[#allocation4] sm:$0xff] %vm238, %v231
    %240 = vst.msk [vmem:[#allocation4 + $0x8] sm:$0xff] %vm238, %v232
    %241 = vst.msk [vmem:[#allocation4 + $0x10] sm:$0xff] %vm238, %v233
    %242 = vst.msk [vmem:[#allocation4 + $0x18] sm:$0xff] %vm238, %v234
    %243 = vst.msk [vmem:[#allocation4 + $0x20] sm:$0xff] %vm238, %v235
    %244 = vst.msk [vmem:[#allocation4 + $0x28] sm:$0xff] %vm238, %v236
    %245 = vst.msk [vmem:[#allocation4 + $0x30] sm:$0xff] %vm238, %v237
    %v246 = vld [vmem:[%s3] sm:$0xf]
    %v247 = vld [vmem:[%s4] sm:$0x1]
    %v249 = vlaneseq
    %v250 = vshrl.u32 %v249, 7
    %v251 = vsub.s32 0, %v250
    %v252 = vrot.slane %v247, %v251
    %v255 = vsel %vm99, %v246, 0
    %257 = vmatprep.subr.mxu0 0.0
    %258 = vmatpush1.msra.mxu0 %v255
    %259 = vmatprep.subr.mxu0 0.0
    %260 = vmatpush1.msra.mxu0 0.0
    %261 = vmatprep.subr.mxu0 0.0
    %262 = vmatpush1.msra.mxu0 0.0
    %263 = vmatprep.subr.mxu0 0.0
    %264 = vmatpush1.msra.mxu0 0.0
    %265 = vmatprep.subr.mxu0 0.0
    %266 = vmatpush1.msra.mxu0 0.0
    %267 = vmatprep.subr.mxu0 0.0
    %268 = vmatpush1.msra.mxu0 0.0
    %269 = vmatprep.subr.mxu0 0.0
    %270 = vmatpush1.msra.mxu0 0.0
    %271 = vmatprep.subr.mxu0 0.0
    %272 = vmatpush1.msra.mxu0 0.0
    %273 = vmatprep.subr.mxu0 0.0
    %274 = vmatpush1.msra.mxu0 0.0
    %275 = vmatprep.subr.mxu0 0.0
    %276 = vmatpush1.msra.mxu0 0.0
    %277 = vmatprep.subr.mxu0 0.0
    %278 = vmatpush1.msra.mxu0 0.0
    %279 = vmatprep.subr.mxu0 0.0
    %280 = vmatpush1.msra.mxu0 0.0
    %281 = vmatprep.subr.mxu0 0.0
    %282 = vmatpush1.msra.mxu0 0.0
    %283 = vmatprep.subr.mxu0 0.0
    %284 = vmatpush1.msra.mxu0 0.0
    %285 = vmatprep.subr.mxu0 0.0
    %286 = vmatpush1.msra.mxu0 0.0
    %287 = vmatprep.subr.mxu0 0.0
    %288 = vmatpush1.msra.mxu0 0.0
    %289 = vmatprep.subr.mxu0 0.0
    %290 = vmatpush1.msra.mxu0 0.0
    %291 = vmatprep.subr.mxu0 0.0
    %292 = vmatpush1.msra.mxu0 0.0
    %293 = vmatprep.subr.mxu0 0.0
    %294 = vmatpush1.msra.mxu0 0.0
    %295 = vmatprep.subr.mxu0 0.0
    %296 = vmatpush1.msra.mxu0 0.0
    %297 = vmatprep.subr.mxu0 0.0
    %298 = vmatpush1.msra.mxu0 0.0
    %299 = vmatprep.subr.mxu0 0.0
    %300 = vmatpush1.msra.mxu0 0.0
    %301 = vmatprep.subr.mxu0 0.0
    %302 = vmatpush1.msra.mxu0 0.0
    %303 = vmatprep.subr.mxu0 0.0
    %304 = vmatpush1.msra.mxu0 0.0
    %305 = vmatprep.subr.mxu0 0.0
    %306 = vmatpush1.msra.mxu0 0.0
    %307 = vmatprep.subr.mxu0 0.0
    %308 = vmatpush1.msra.mxu0 0.0
    %309 = vmatprep.subr.mxu0 0.0
    %310 = vmatpush1.msra.mxu0 0.0
    %311 = vmatprep.subr.mxu0 0.0
    %312 = vmatpush1.msra.mxu0 0.0
    %313 = vmatprep.subr.mxu0 0.0
    %314 = vmatpush1.msra.mxu0 0.0
    %315 = vmatprep.subr.mxu0 0.0
    %316 = vmatpush1.msra.mxu0 0.0
    %317 = vmatprep.subr.mxu0 0.0
    %318 = vmatpush1.msra.mxu0 0.0
    %319 = vmatprep.subr.mxu0 0.0
    %320 = vmatpush1.msra.mxu0 0.0
    %321 = vmatprep.mubr.f32.mxu0 0.0
    %322 = vmatmul.mubr.f32.gmra.mrb[0].mxu0 %v76
    %v323 = vpop.f32.mrb[0].mxu0
    %v324 = vadd.f32 %v252, %v323
    %v325 = vpop.f32.mrb[0].mxu0
    %326 = vdwg.mxu0
    %v327 = vmul.f32 %v324, 1.442695
    %v328 = vpow.pop %v327
    %v329 = vld [vmem:[%s1] sm:$0xff]
    %331 = vrot.lane.b32.xlu0 %v329, 16
    %v332 = vpop.permute.xlu0 %331
    %v334 = vmul.f32 %v328, %v332
    %336 = vrot.lane.b32.xlu0 %v334, 112
    %v337 = vpop.permute.xlu0 %336
    %v339 = vadd.f32 %v324, %v337
    %vm340 = vcmask 130048
    %341 = vst.msk [vmem:[#allocation3] sm:$0xff] %vm340, %v339
    %v342 = vld [vmem:[%s12] sm:$0x1]
    %v343 = vmul.f32 %v342, 0.1
    %v345 = vlaneseq
    %v346 = vshrl.u32 %v345, 7
    %v347 = vsub.s32 0, %v346
    %v348 = vrot.slane %v343, %v347
    %v350 = vld [vmem:[%s9] sm:$0x1]
    %v352 = vlaneseq
    %v353 = vshrl.u32 %v352, 7
    %v354 = vsub.s32 0, %v353
    %v355 = vrot.slane %v350, %v354
    %v357 = vld [vmem:[%s7] sm:$0xf]
    %v358 = vld [vmem:[%s7 + $0x4] sm:$0xf]
    %v359 = vld [vmem:[%s8] sm:$0xf]
    %v360 = vld [vmem:[%s8 + $0x4] sm:$0xf]
    %v361 = vld [vmem:[%s8 + $0x8] sm:$0xf]
    %v362 = vld [vmem:[%s8 + $0xc] sm:$0xf]
    %v363 = vld [vmem:[%s8 + $0x10] sm:$0xf]
    %v364 = vld [vmem:[%s8 + $0x14] sm:$0xf]
    %v365 = vld [vmem:[%s8 + $0x18] sm:$0xf]
    %v366 = vld [vmem:[%s8 + $0x1c] sm:$0xf]
    %v367 = vpack.c.bf16 %v339, %v339
    %v368 = vld [vmem:[#allocation2 + $0x8] sm:$0xff]
    %v371 = vunpack.c.l.b16 %v357
    %v372 = vunpack.c.l.b16 %v358
    %v373 = vpack.c.b16 %v372, %v371
    %v376 = vsel %vm340, %v367, 0
    %378 = vmatprep.subr.bf16.mxu0 0
    %379 = vmatpush1.bf16.msra.mxu0 %v373
    %380 = vmatprep.subr.bf16.mxu0 0
    %381 = vmatpush1.bf16.msra.mxu0 0
    %382 = vmatprep.subr.bf16.mxu0 0
    %383 = vmatpush1.bf16.msra.mxu0 0
    %384 = vmatprep.subr.bf16.mxu0 0
    %385 = vmatpush1.bf16.msra.mxu0 0
    %386 = vmatprep.subr.bf16.mxu0 0
    %387 = vmatpush1.bf16.msra.mxu0 0
    %388 = vmatprep.subr.bf16.mxu0 0
    %389 = vmatpush1.bf16.msra.mxu0 0
    %390 = vmatprep.subr.bf16.mxu0 0
    %391 = vmatpush1.bf16.msra.mxu0 0
    %392 = vmatprep.subr.bf16.mxu0 0
    %393 = vmatpush1.bf16.msra.mxu0 0
    %394 = vmatprep.subr.bf16.mxu0 0
    %395 = vmatpush1.bf16.msra.mxu0 0
    %396 = vmatprep.subr.bf16.mxu0 0
    %397 = vmatpush1.bf16.msra.mxu0 0
    %398 = vmatprep.subr.bf16.mxu0 0
    %399 = vmatpush1.bf16.msra.mxu0 0
    %400 = vmatprep.subr.bf16.mxu0 0
    %401 = vmatpush1.bf16.msra.mxu0 0
    %402 = vmatprep.subr.bf16.mxu0 0
    %403 = vmatpush1.bf16.msra.mxu0 0
    %404 = vmatprep.subr.bf16.mxu0 0
    %405 = vmatpush1.bf16.msra.mxu0 0
    %406 = vmatprep.subr.bf16.mxu0 0
    %407 = vmatpush1.bf16.msra.mxu0 0
    %408 = vmatprep.subr.bf16.mxu0 0
    %409 = vmatpush1.bf16.msra.mxu0 0
    %410 = vmatprep.mubr.bf16.mxu0 0
    %411 = vmatmul.mubr.bf16.gmra.mrb[0].mxu0 %v376
    %v412 = vpop.f32.mrb[0].mxu0
    %v413 = vadd.f32 %v368, %v412
    %v414 = vpop.f32.mrb[0].mxu0
    %v415 = vpop.f32.mrb[0].mxu0
    %v416 = vpop.f32.mrb[0].mxu0
    %417 = vdwg.mxu0
    %v418 = vtanh.pop %v413
    %v419 = vpack.c.bf16 %v418, %v418
    %v428 = vunpack.c.l.b16 %v359
    %v429 = vunpack.c.l.b16 %v360
    %v430 = vunpack.c.l.b16 %v361
    %v431 = vunpack.c.l.b16 %v362
    %v432 = vunpack.c.l.b16 %v363
    %v433 = vunpack.c.l.b16 %v364
    %v434 = vunpack.c.l.b16 %v365
    %v435 = vunpack.c.l.b16 %v366
    %v436 = vpack.c.b16 %v429, %v428
    %v437 = vpack.c.b16 %v431, %v430
    %v438 = vpack.c.b16 %v433, %v432
    %v439 = vpack.c.b16 %v435, %v434
    %v445 = vsel %vm208, %v419, 0
    %447 = vmatprep.subr.bf16.mxu0 0
    %448 = vmatpush1.bf16.msra.mxu0 %v436
    %449 = vmatprep.subr.bf16.mxu0 0
    %450 = vmatpush1.bf16.msra.mxu0 %v437
    %451 = vmatprep.subr.bf16.mxu0 0
    %452 = vmatpush1.bf16.msra.mxu0 %v438
    %453 = vmatprep.subr.bf16.mxu0 0
    %454 = vmatpush1.bf16.msra.mxu0 %v439
    %455 = vmatprep.subr.bf16.mxu0 0
    %456 = vmatpush1.bf16.msra.mxu0 0
    %457 = vmatprep.subr.bf16.mxu0 0
    %458 = vmatpush1.bf16.msra.mxu0 0
    %459 = vmatprep.subr.bf16.mxu0 0
    %460 = vmatpush1.bf16.msra.mxu0 0
    %461 = vmatprep.subr.bf16.mxu0 0
    %462 = vmatpush1.bf16.msra.mxu0 0
    %463 = vmatprep.subr.bf16.mxu0 0
    %464 = vmatpush1.bf16.msra.mxu0 0
    %465 = vmatprep.subr.bf16.mxu0 0
    %466 = vmatpush1.bf16.msra.mxu0 0
    %467 = vmatprep.subr.bf16.mxu0 0
    %468 = vmatpush1.bf16.msra.mxu0 0
    %469 = vmatprep.subr.bf16.mxu0 0
    %470 = vmatpush1.bf16.msra.mxu0 0
    %471 = vmatprep.subr.bf16.mxu0 0
    %472 = vmatpush1.bf16.msra.mxu0 0
    %473 = vmatprep.subr.bf16.mxu0 0
    %474 = vmatpush1.bf16.msra.mxu0 0
    %475 = vmatprep.subr.bf16.mxu0 0
    %476 = vmatpush1.bf16.msra.mxu0 0
    %477 = vmatprep.subr.bf16.mxu0 0
    %478 = vmatpush1.bf16.msra.mxu0 0
    %479 = vmatprep.mubr.bf16.mxu0 0
    %480 = vmatmul.mubr.bf16.gmra.mrb[0].mxu0 %v445
    %v481 = vpop.f32.mrb[0].mxu0
    %v482 = vadd.f32 %v355, %v481
    %v483 = vpop.f32.mrb[0].mxu0
    %v484 = vpop.f32.mrb[0].mxu0
    %v485 = vpop.f32.mrb[0].mxu0
    %486 = vdwg.mxu0
    %v487 = vmul.f32 %v482, %v482
    %v488 = vsel %vm238, %v487, 0.0
    %489 = vadd.xlane.f32.xlu0 %v488
    %v490 = vpop.xlane.xlu0 %489
    %v491 = vadd.f32 %v490, 0.0
    %v492 = vld [vmem:[#allocation4] sm:$0xff]
    %494 = vrot.lane.b32.xlu0 %v339, 120
    %v495 = vpop.permute.xlu0 %494
    %v497 = vmul.f32 %v348, %v495
    %499 = vrot.lane.b32.xlu0 %v492, 8
    %v500 = vpop.permute.xlu0 %499
    %v502 = vadd.f32 %v482, %v500
    %v503 = vsel %vm238, %v497, %v502
    %v504 = vadd.f32 %v339, %v503
    %505 = vst.msk [vmem:[#allocation3 + $0x8] sm:$0xff] %vm340, %v504
    %v506 = vpack.c.bf16 %v504, %v504
    %v507 = vld [vmem:[#allocation2 + $0x10] sm:$0xff]
    %v509 = vsel %vm340, %v506, 0
    %511 = vmatprep.subr.bf16.mxu0 0
    %512 = vmatpush1.bf16.msra.mxu0 %v373
    %513 = vmatprep.subr.bf16.mxu0 0
    %514 = vmatpush1.bf16.msra.mxu0 0
    %515 = vmatprep.subr.bf16.mxu0 0
    %516 = vmatpush1.bf16.msra.mxu0 0
    %517 = vmatprep.subr.bf16.mxu0 0
    %518 = vmatpush1.bf16.msra.mxu0 0
    %519 = vmatprep.subr.bf16.mxu0 0
    %520 = vmatpush1.bf16.msra.mxu0 0
    %521 = vmatprep.subr.bf16.mxu0 0
    %522 = vmatpush1.bf16.msra.mxu0 0
    %523 = vmatprep.subr.bf16.mxu0 0
    %524 = vmatpush1.bf16.msra.mxu0 0
    %525 = vmatprep.subr.bf16.mxu0 0
    %526 = vmatpush1.bf16.msra.mxu0 0
    %527 = vmatprep.subr.bf16.mxu0 0
    %528 = vmatpush1.bf16.msra.mxu0 0
    %529 = vmatprep.subr.bf16.mxu0 0
    %530 = vmatpush1.bf16.msra.mxu0 0
    %531 = vmatprep.subr.bf16.mxu0 0
    %532 = vmatpush1.bf16.msra.mxu0 0
    %533 = vmatprep.subr.bf16.mxu0 0
    %534 = vmatpush1.bf16.msra.mxu0 0
    %535 = vmatprep.subr.bf16.mxu0 0
    %536 = vmatpush1.bf16.msra.mxu0 0
    %537 = vmatprep.subr.bf16.mxu0 0
    %538 = vmatpush1.bf16.msra.mxu0 0
    %539 = vmatprep.subr.bf16.mxu0 0
    %540 = vmatpush1.bf16.msra.mxu0 0
    %541 = vmatprep.subr.bf16.mxu0 0
    %542 = vmatpush1.bf16.msra.mxu0 0
    %543 = vmatprep.mubr.bf16.mxu0 0
    %544 = vmatmul.mubr.bf16.gmra.mrb[0].mxu0 %v509
    %v545 = vpop.f32.mrb[0].mxu0
    %v546 = vadd.f32 %v507, %v545
    %v547 = vpop.f32.mrb[0].mxu0
    %v548 = vpop.f32.mrb[0].mxu0
    %v549 = vpop.f32.mrb[0].mxu0
    %550 = vdwg.mxu0
    %v551 = vtanh.pop %v546
    %v552 = vpack.c.bf16 %v551, %v551
    %v554 = vsel %vm208, %v552, 0
    %556 = vmatprep.subr.bf16.mxu0 0
    %557 = vmatpush1.bf16.msra.mxu0 %v436
    %558 = vmatprep.subr.bf16.mxu0 0
    %559 = vmatpush1.bf16.msra.mxu0 %v437
    %560 = vmatprep.subr.bf16.mxu0 0
    %561 = vmatpush1.bf16.msra.mxu0 %v438
    %562 = vmatprep.subr.bf16.mxu0 0
    %563 = vmatpush1.bf16.msra.mxu0 %v439
    %564 = vmatprep.subr.bf16.mxu0 0
    %565 = vmatpush1.bf16.msra.mxu0 0
    %566 = vmatprep.subr.bf16.mxu0 0
    %567 = vmatpush1.bf16.msra.mxu0 0
    %568 = vmatprep.subr.bf16.mxu0 0
    %569 = vmatpush1.bf16.msra.mxu0 0
    %570 = vmatprep.subr.bf16.mxu0 0
    %571 = vmatpush1.bf16.msra.mxu0 0
    %572 = vmatprep.subr.bf16.mxu0 0
    %573 = vmatpush1.bf16.msra.mxu0 0
    %574 = vmatprep.subr.bf16.mxu0 0
    %575 = vmatpush1.bf16.msra.mxu0 0
    %576 = vmatprep.subr.bf16.mxu0 0
    %577 = vmatpush1.bf16.msra.mxu0 0
    %578 = vmatprep.subr.bf16.mxu0 0
    %579 = vmatpush1.bf16.msra.mxu0 0
    %580 = vmatprep.subr.bf16.mxu0 0
    %581 = vmatpush1.bf16.msra.mxu0 0
    %582 = vmatprep.subr.bf16.mxu0 0
    %583 = vmatpush1.bf16.msra.mxu0 0
    %584 = vmatprep.subr.bf16.mxu0 0
    %585 = vmatpush1.bf16.msra.mxu0 0
    %586 = vmatprep.subr.bf16.mxu0 0
    %587 = vmatpush1.bf16.msra.mxu0 0
    %588 = vmatprep.mubr.bf16.mxu0 0
    %589 = vmatmul.mubr.bf16.gmra.mrb[0].mxu0 %v554
    %v590 = vpop.f32.mrb[0].mxu0
    %v591 = vadd.f32 %v355, %v590
    %v592 = vpop.f32.mrb[0].mxu0
    %v593 = vpop.f32.mrb[0].mxu0
    %v594 = vpop.f32.mrb[0].mxu0
    %595 = vdwg.mxu0
    %v596 = vmul.f32 %v591, %v591
    %v597 = vsel %vm238, %v596, 0.0
    %598 = vadd.xlane.f32.xlu0 %v597
    %v599 = vpop.xlane.xlu0 %598
    %v600 = vadd.f32 %v491, %v599
    %v601 = vld [vmem:[#allocation4 + $0x8] sm:$0xff]
    %603 = vrot.lane.b32.xlu0 %v504, 120
    %v604 = vpop.permute.xlu0 %603
    %v606 = vmul.f32 %v348, %v604
    %608 = vrot.lane.b32.xlu0 %v601, 8
    %v609 = vpop.permute.xlu0 %608
    %v611 = vadd.f32 %v591, %v609
    %v612 = vsel %vm238, %v606, %v611
    %v613 = vadd.f32 %v504, %v612
    %614 = vst.msk [vmem:[#allocation3 + $0x10] sm:$0xff] %vm340, %v613
    %v615 = vpack.c.bf16 %v613, %v613
    %v616 = vld [vmem:[#allocation2 + $0x18] sm:$0xff]
    %v618 = vsel %vm340, %v615, 0
    %620 = vmatprep.subr.bf16.mxu0 0
    %621 = vmatpush1.bf16.msra.mxu0 %v373
    %622 = vmatprep.subr.bf16.mxu0 0
    %623 = vmatpush1.bf16.msra.mxu0 0
    %624 = vmatprep.subr.bf16.mxu0 0
    %625 = vmatpush1.bf16.msra.mxu0 0
    %626 = vmatprep.subr.bf16.mxu0 0
    %627 = vmatpush1.bf16.msra.mxu0 0
    %628 = vmatprep.subr.bf16.mxu0 0
    %629 = vmatpush1.bf16.msra.mxu0 0
    %630 = vmatprep.subr.bf16.mxu0 0
    %631 = vmatpush1.bf16.msra.mxu0 0
    %632 = vmatprep.subr.bf16.mxu0 0
    %633 = vmatpush1.bf16.msra.mxu0 0
    %634 = vmatprep.subr.bf16.mxu0 0
    %635 = vmatpush1.bf16.msra.mxu0 0
    %636 = vmatprep.subr.bf16.mxu0 0
    %637 = vmatpush1.bf16.msra.mxu0 0
    %638 = vmatprep.subr.bf16.mxu0 0
    %639 = vmatpush1.bf16.msra.mxu0 0
    %640 = vmatprep.subr.bf16.mxu0 0
    %641 = vmatpush1.bf16.msra.mxu0 0
    %642 = vmatprep.subr.bf16.mxu0 0
    %643 = vmatpush1.bf16.msra.mxu0 0
    %644 = vmatprep.subr.bf16.mxu0 0
    %645 = vmatpush1.bf16.msra.mxu0 0
    %646 = vmatprep.subr.bf16.mxu0 0
    %647 = vmatpush1.bf16.msra.mxu0 0
    %648 = vmatprep.subr.bf16.mxu0 0
    %649 = vmatpush1.bf16.msra.mxu0 0
    %650 = vmatprep.subr.bf16.mxu0 0
    %651 = vmatpush1.bf16.msra.mxu0 0
    %652 = vmatprep.mubr.bf16.mxu0 0
    %653 = vmatmul.mubr.bf16.gmra.mrb[0].mxu0 %v618
    %v654 = vpop.f32.mrb[0].mxu0
    %v655 = vadd.f32 %v616, %v654
    %v656 = vpop.f32.mrb[0].mxu0
    %v657 = vpop.f32.mrb[0].mxu0
    %v658 = vpop.f32.mrb[0].mxu0
    %659 = vdwg.mxu0
    %v660 = vtanh.pop %v655
    %v661 = vpack.c.bf16 %v660, %v660
    %v663 = vsel %vm208, %v661, 0
    %665 = vmatprep.subr.bf16.mxu0 0
    %666 = vmatpush1.bf16.msra.mxu0 %v436
    %667 = vmatprep.subr.bf16.mxu0 0
    %668 = vmatpush1.bf16.msra.mxu0 %v437
    %669 = vmatprep.subr.bf16.mxu0 0
    %670 = vmatpush1.bf16.msra.mxu0 %v438
    %671 = vmatprep.subr.bf16.mxu0 0
    %672 = vmatpush1.bf16.msra.mxu0 %v439
    %673 = vmatprep.subr.bf16.mxu0 0
    %674 = vmatpush1.bf16.msra.mxu0 0
    %675 = vmatprep.subr.bf16.mxu0 0
    %676 = vmatpush1.bf16.msra.mxu0 0
    %677 = vmatprep.subr.bf16.mxu0 0
    %678 = vmatpush1.bf16.msra.mxu0 0
    %679 = vmatprep.subr.bf16.mxu0 0
    %680 = vmatpush1.bf16.msra.mxu0 0
    %681 = vmatprep.subr.bf16.mxu0 0
    %682 = vmatpush1.bf16.msra.mxu0 0
    %683 = vmatprep.subr.bf16.mxu0 0
    %684 = vmatpush1.bf16.msra.mxu0 0
    %685 = vmatprep.subr.bf16.mxu0 0
    %686 = vmatpush1.bf16.msra.mxu0 0
    %687 = vmatprep.subr.bf16.mxu0 0
    %688 = vmatpush1.bf16.msra.mxu0 0
    %689 = vmatprep.subr.bf16.mxu0 0
    %690 = vmatpush1.bf16.msra.mxu0 0
    %691 = vmatprep.subr.bf16.mxu0 0
    %692 = vmatpush1.bf16.msra.mxu0 0
    %693 = vmatprep.subr.bf16.mxu0 0
    %694 = vmatpush1.bf16.msra.mxu0 0
    %695 = vmatprep.subr.bf16.mxu0 0
    %696 = vmatpush1.bf16.msra.mxu0 0
    %697 = vmatprep.mubr.bf16.mxu0 0
    %698 = vmatmul.mubr.bf16.gmra.mrb[0].mxu0 %v663
    %v699 = vpop.f32.mrb[0].mxu0
    %v700 = vadd.f32 %v355, %v699
    %v701 = vpop.f32.mrb[0].mxu0
    %v702 = vpop.f32.mrb[0].mxu0
    %v703 = vpop.f32.mrb[0].mxu0
    %704 = vdwg.mxu0
    %v705 = vmul.f32 %v700, %v700
    %v706 = vsel %vm238, %v705, 0.0
    %707 = vadd.xlane.f32.xlu0 %v706
    %v708 = vpop.xlane.xlu0 %707
    %v709 = vadd.f32 %v600, %v708
    %v710 = vld [vmem:[#allocation4 + $0x10] sm:$0xff]
    %712 = vrot.lane.b32.xlu0 %v613, 120
    %v713 = vpop.permute.xlu0 %712
    %v715 = vmul.f32 %v348, %v713
    %717 = vrot.lane.b32.xlu0 %v710, 8
    %v718 = vpop.permute.xlu0 %717
    %v720 = vadd.f32 %v700, %v718
    %v721 = vsel %vm238, %v715, %v720
    %v722 = vadd.f32 %v613, %v721
    %723 = vst.msk [vmem:[#allocation3 + $0x18] sm:$0xff] %vm340, %v722
    %v724 = vpack.c.bf16 %v722, %v722
    %v725 = vld [vmem:[#allocation2 + $0x20] sm:$0xff]
    %v727 = vsel %vm340, %v724, 0
    %729 = vmatprep.subr.bf16.mxu0 0
    %730 = vmatpush1.bf16.msra.mxu0 %v373
    %731 = vmatprep.subr.bf16.mxu0 0
    %732 = vmatpush1.bf16.msra.mxu0 0
    %733 = vmatprep.subr.bf16.mxu0 0
    %734 = vmatpush1.bf16.msra.mxu0 0
    %735 = vmatprep.subr.bf16.mxu0 0
    %736 = vmatpush1.bf16.msra.mxu0 0
    %737 = vmatprep.subr.bf16.mxu0 0
    %738 = vmatpush1.bf16.msra.mxu0 0
    %739 = vmatprep.subr.bf16.mxu0 0
    %740 = vmatpush1.bf16.msra.mxu0 0
    %741 = vmatprep.subr.bf16.mxu0 0
    %742 = vmatpush1.bf16.msra.mxu0 0
    %743 = vmatprep.subr.bf16.mxu0 0
    %744 = vmatpush1.bf16.msra.mxu0 0
    %745 = vmatprep.subr.bf16.mxu0 0
    %746 = vmatpush1.bf16.msra.mxu0 0
    %747 = vmatprep.subr.bf16.mxu0 0
    %748 = vmatpush1.bf16.msra.mxu0 0
    %749 = vmatprep.subr.bf16.mxu0 0
    %750 = vmatpush1.bf16.msra.mxu0 0
    %751 = vmatprep.subr.bf16.mxu0 0
    %752 = vmatpush1.bf16.msra.mxu0 0
    %753 = vmatprep.subr.bf16.mxu0 0
    %754 = vmatpush1.bf16.msra.mxu0 0
    %755 = vmatprep.subr.bf16.mxu0 0
    %756 = vmatpush1.bf16.msra.mxu0 0
    %757 = vmatprep.subr.bf16.mxu0 0
    %758 = vmatpush1.bf16.msra.mxu0 0
    %759 = vmatprep.subr.bf16.mxu0 0
    %760 = vmatpush1.bf16.msra.mxu0 0
    %761 = vmatprep.mubr.bf16.mxu0 0
    %762 = vmatmul.mubr.bf16.gmra.mrb[0].mxu0 %v727
    %v763 = vpop.f32.mrb[0].mxu0
    %v764 = vadd.f32 %v725, %v763
    %v765 = vpop.f32.mrb[0].mxu0
    %v766 = vpop.f32.mrb[0].mxu0
    %v767 = vpop.f32.mrb[0].mxu0
    %768 = vdwg.mxu0
    %v769 = vtanh.pop %v764
    %v770 = vpack.c.bf16 %v769, %v769
    %v772 = vsel %vm208, %v770, 0
    %774 = vmatprep.subr.bf16.mxu0 0
    %775 = vmatpush1.bf16.msra.mxu0 %v436
    %776 = vmatprep.subr.bf16.mxu0 0
    %777 = vmatpush1.bf16.msra.mxu0 %v437
    %778 = vmatprep.subr.bf16.mxu0 0
    %779 = vmatpush1.bf16.msra.mxu0 %v438
    %780 = vmatprep.subr.bf16.mxu0 0
    %781 = vmatpush1.bf16.msra.mxu0 %v439
    %782 = vmatprep.subr.bf16.mxu0 0
    %783 = vmatpush1.bf16.msra.mxu0 0
    %784 = vmatprep.subr.bf16.mxu0 0
    %785 = vmatpush1.bf16.msra.mxu0 0
    %786 = vmatprep.subr.bf16.mxu0 0
    %787 = vmatpush1.bf16.msra.mxu0 0
    %788 = vmatprep.subr.bf16.mxu0 0
    %789 = vmatpush1.bf16.msra.mxu0 0
    %790 = vmatprep.subr.bf16.mxu0 0
    %791 = vmatpush1.bf16.msra.mxu0 0
    %792 = vmatprep.subr.bf16.mxu0 0
    %793 = vmatpush1.bf16.msra.mxu0 0
    %794 = vmatprep.subr.bf16.mxu0 0
    %795 = vmatpush1.bf16.msra.mxu0 0
    %796 = vmatprep.subr.bf16.mxu0 0
    %797 = vmatpush1.bf16.msra.mxu0 0
    %798 = vmatprep.subr.bf16.mxu0 0
    %799 = vmatpush1.bf16.msra.mxu0 0
    %800 = vmatprep.subr.bf16.mxu0 0
    %801 = vmatpush1.bf16.msra.mxu0 0
    %802 = vmatprep.subr.bf16.mxu0 0
    %803 = vmatpush1.bf16.msra.mxu0 0
    %804 = vmatprep.subr.bf16.mxu0 0
    %805 = vmatpush1.bf16.msra.mxu0 0
    %806 = vmatprep.mubr.bf16.mxu0 0
    %807 = vmatmul.mubr.bf16.gmra.mrb[0].mxu0 %v772
    %v808 = vpop.f32.mrb[0].mxu0
    %v809 = vadd.f32 %v355, %v808
    %v810 = vpop.f32.mrb[0].mxu0
    %v811 = vpop.f32.mrb[0].mxu0
    %v812 = vpop.f32.mrb[0].mxu0
    %813 = vdwg.mxu0
    %v814 = vmul.f32 %v809, %v809
    %v815 = vsel %vm238, %v814, 0.0
    %816 = vadd.xlane.f32.xlu0 %v815
    %v817 = vpop.xlane.xlu0 %816
    %v818 = vadd.f32 %v709, %v817
    %v819 = vld [vmem:[#allocation4 + $0x18] sm:$0xff]
    %821 = vrot.lane.b32.xlu0 %v722, 120
    %v822 = vpop.permute.xlu0 %821
    %v824 = vmul.f32 %v348, %v822
    %826 = vrot.lane.b32.xlu0 %v819, 8
    %v827 = vpop.permute.xlu0 %826
    %v829 = vadd.f32 %v809, %v827
    %v830 = vsel %vm238, %v824, %v829
    %v831 = vadd.f32 %v722, %v830
    %832 = vst.msk [vmem:[#allocation3 + $0x20] sm:$0xff] %vm340, %v831
    %v833 = vpack.c.bf16 %v831, %v831
    %v834 = vld [vmem:[#allocation2 + $0x28] sm:$0xff]
    %v836 = vsel %vm340, %v833, 0
    %838 = vmatprep.subr.bf16.mxu0 0
    %839 = vmatpush1.bf16.msra.mxu0 %v373
    %840 = vmatprep.subr.bf16.mxu0 0
    %841 = vmatpush1.bf16.msra.mxu0 0
    %842 = vmatprep.subr.bf16.mxu0 0
    %843 = vmatpush1.bf16.msra.mxu0 0
    %844 = vmatprep.subr.bf16.mxu0 0
    %845 = vmatpush1.bf16.msra.mxu0 0
    %846 = vmatprep.subr.bf16.mxu0 0
    %847 = vmatpush1.bf16.msra.mxu0 0
    %848 = vmatprep.subr.bf16.mxu0 0
    %849 = vmatpush1.bf16.msra.mxu0 0
    %850 = vmatprep.subr.bf16.mxu0 0
    %851 = vmatpush1.bf16.msra.mxu0 0
    %852 = vmatprep.subr.bf16.mxu0 0
    %853 = vmatpush1.bf16.msra.mxu0 0
    %854 = vmatprep.subr.bf16.mxu0 0
    %855 = vmatpush1.bf16.msra.mxu0 0
    %856 = vmatprep.subr.bf16.mxu0 0
    %857 = vmatpush1.bf16.msra.mxu0 0
    %858 = vmatprep.subr.bf16.mxu0 0
    %859 = vmatpush1.bf16.msra.mxu0 0
    %860 = vmatprep.subr.bf16.mxu0 0
    %861 = vmatpush1.bf16.msra.mxu0 0
    %862 = vmatprep.subr.bf16.mxu0 0
    %863 = vmatpush1.bf16.msra.mxu0 0
    %864 = vmatprep.subr.bf16.mxu0 0
    %865 = vmatpush1.bf16.msra.mxu0 0
    %866 = vmatprep.subr.bf16.mxu0 0
    %867 = vmatpush1.bf16.msra.mxu0 0
    %868 = vmatprep.subr.bf16.mxu0 0
    %869 = vmatpush1.bf16.msra.mxu0 0
    %870 = vmatprep.mubr.bf16.mxu0 0
    %871 = vmatmul.mubr.bf16.gmra.mrb[0].mxu0 %v836
    %v872 = vpop.f32.mrb[0].mxu0
    %v873 = vadd.f32 %v834, %v872
    %v874 = vpop.f32.mrb[0].mxu0
    %v875 = vpop.f32.mrb[0].mxu0
    %v876 = vpop.f32.mrb[0].mxu0
    %877 = vdwg.mxu0
    %v878 = vtanh.pop %v873
    %v879 = vpack.c.bf16 %v878, %v878
    %v881 = vsel %vm208, %v879, 0
    %883 = vmatprep.subr.bf16.mxu0 0
    %884 = vmatpush1.bf16.msra.mxu0 %v436
    %885 = vmatprep.subr.bf16.mxu0 0
    %886 = vmatpush1.bf16.msra.mxu0 %v437
    %887 = vmatprep.subr.bf16.mxu0 0
    %888 = vmatpush1.bf16.msra.mxu0 %v438
    %889 = vmatprep.subr.bf16.mxu0 0
    %890 = vmatpush1.bf16.msra.mxu0 %v439
    %891 = vmatprep.subr.bf16.mxu0 0
    %892 = vmatpush1.bf16.msra.mxu0 0
    %893 = vmatprep.subr.bf16.mxu0 0
    %894 = vmatpush1.bf16.msra.mxu0 0
    %895 = vmatprep.subr.bf16.mxu0 0
    %896 = vmatpush1.bf16.msra.mxu0 0
    %897 = vmatprep.subr.bf16.mxu0 0
    %898 = vmatpush1.bf16.msra.mxu0 0
    %899 = vmatprep.subr.bf16.mxu0 0
    %900 = vmatpush1.bf16.msra.mxu0 0
    %901 = vmatprep.subr.bf16.mxu0 0
    %902 = vmatpush1.bf16.msra.mxu0 0
    %903 = vmatprep.subr.bf16.mxu0 0
    %904 = vmatpush1.bf16.msra.mxu0 0
    %905 = vmatprep.subr.bf16.mxu0 0
    %906 = vmatpush1.bf16.msra.mxu0 0
    %907 = vmatprep.subr.bf16.mxu0 0
    %908 = vmatpush1.bf16.msra.mxu0 0
    %909 = vmatprep.subr.bf16.mxu0 0
    %910 = vmatpush1.bf16.msra.mxu0 0
    %911 = vmatprep.subr.bf16.mxu0 0
    %912 = vmatpush1.bf16.msra.mxu0 0
    %913 = vmatprep.subr.bf16.mxu0 0
    %914 = vmatpush1.bf16.msra.mxu0 0
    %915 = vmatprep.mubr.bf16.mxu0 0
    %916 = vmatmul.mubr.bf16.gmra.mrb[0].mxu0 %v881
    %v917 = vpop.f32.mrb[0].mxu0
    %v918 = vadd.f32 %v355, %v917
    %v919 = vpop.f32.mrb[0].mxu0
    %v920 = vpop.f32.mrb[0].mxu0
    %v921 = vpop.f32.mrb[0].mxu0
    %922 = vdwg.mxu0
    %v923 = vmul.f32 %v918, %v918
    %v924 = vsel %vm238, %v923, 0.0
    %925 = vadd.xlane.f32.xlu0 %v924
    %v926 = vpop.xlane.xlu0 %925
    %v927 = vadd.f32 %v818, %v926
    %v928 = vld [vmem:[#allocation4 + $0x20] sm:$0xff]
    %930 = vrot.lane.b32.xlu0 %v831, 120
    %v931 = vpop.permute.xlu0 %930
    %v933 = vmul.f32 %v348, %v931
    %935 = vrot.lane.b32.xlu0 %v928, 8
    %v936 = vpop.permute.xlu0 %935
    %v938 = vadd.f32 %v918, %v936
    %v939 = vsel %vm238, %v933, %v938
    %v940 = vadd.f32 %v831, %v939
    %941 = vst.msk [vmem:[#allocation3 + $0x28] sm:$0xff] %vm340, %v940
    %v942 = vpack.c.bf16 %v940, %v940
    %v943 = vld [vmem:[#allocation2 + $0x30] sm:$0xff]
    %v945 = vsel %vm340, %v942, 0
    %947 = vmatprep.subr.bf16.mxu0 0
    %948 = vmatpush1.bf16.msra.mxu0 %v373
    %949 = vmatprep.subr.bf16.mxu0 0
    %950 = vmatpush1.bf16.msra.mxu0 0
    %951 = vmatprep.subr.bf16.mxu0 0
    %952 = vmatpush1.bf16.msra.mxu0 0
    %953 = vmatprep.subr.bf16.mxu0 0
    %954 = vmatpush1.bf16.msra.mxu0 0
    %955 = vmatprep.subr.bf16.mxu0 0
    %956 = vmatpush1.bf16.msra.mxu0 0
    %957 = vmatprep.subr.bf16.mxu0 0
    %958 = vmatpush1.bf16.msra.mxu0 0
    %959 = vmatprep.subr.bf16.mxu0 0
    %960 = vmatpush1.bf16.msra.mxu0 0
    %961 = vmatprep.subr.bf16.mxu0 0
    %962 = vmatpush1.bf16.msra.mxu0 0
    %963 = vmatprep.subr.bf16.mxu0 0
    %964 = vmatpush1.bf16.msra.mxu0 0
    %965 = vmatprep.subr.bf16.mxu0 0
    %966 = vmatpush1.bf16.msra.mxu0 0
    %967 = vmatprep.subr.bf16.mxu0 0
    %968 = vmatpush1.bf16.msra.mxu0 0
    %969 = vmatprep.subr.bf16.mxu0 0
    %970 = vmatpush1.bf16.msra.mxu0 0
    %971 = vmatprep.subr.bf16.mxu0 0
    %972 = vmatpush1.bf16.msra.mxu0 0
    %973 = vmatprep.subr.bf16.mxu0 0
    %974 = vmatpush1.bf16.msra.mxu0 0
    %975 = vmatprep.subr.bf16.mxu0 0
    %976 = vmatpush1.bf16.msra.mxu0 0
    %977 = vmatprep.subr.bf16.mxu0 0
    %978 = vmatpush1.bf16.msra.mxu0 0
    %979 = vmatprep.mubr.bf16.mxu0 0
    %980 = vmatmul.mubr.bf16.gmra.mrb[0].mxu0 %v945
    %v981 = vpop.f32.mrb[0].mxu0
    %v982 = vadd.f32 %v943, %v981
    %v983 = vpop.f32.mrb[0].mxu0
    %v984 = vpop.f32.mrb[0].mxu0
    %v985 = vpop.f32.mrb[0].mxu0
    %986 = vdwg.mxu0
    %v987 = vtanh.pop %v982
    %v988 = vpack.c.bf16 %v987, %v987
    %v990 = vsel %vm208, %v988, 0
    %992 = vmatprep.subr.bf16.mxu0 0
    %993 = vmatpush1.bf16.msra.mxu0 %v436
    %994 = vmatprep.subr.bf16.mxu0 0
    %995 = vmatpush1.bf16.msra.mxu0 %v437
    %996 = vmatprep.subr.bf16.mxu0 0
    %997 = vmatpush1.bf16.msra.mxu0 %v438
    %998 = vmatprep.subr.bf16.mxu0 0
    %999 = vmatpush1.bf16.msra.mxu0 %v439
    %1000 = vmatprep.subr.bf16.mxu0 0
    %1001 = vmatpush1.bf16.msra.mxu0 0
    %1002 = vmatprep.subr.bf16.mxu0 0
    %1003 = vmatpush1.bf16.msra.mxu0 0
    %1004 = vmatprep.subr.bf16.mxu0 0
    %1005 = vmatpush1.bf16.msra.mxu0 0
    %1006 = vmatprep.subr.bf16.mxu0 0
    %1007 = vmatpush1.bf16.msra.mxu0 0
    %1008 = vmatprep.subr.bf16.mxu0 0
    %1009 = vmatpush1.bf16.msra.mxu0 0
    %1010 = vmatprep.subr.bf16.mxu0 0
    %1011 = vmatpush1.bf16.msra.mxu0 0
    %1012 = vmatprep.subr.bf16.mxu0 0
    %1013 = vmatpush1.bf16.msra.mxu0 0
    %1014 = vmatprep.subr.bf16.mxu0 0
    %1015 = vmatpush1.bf16.msra.mxu0 0
    %1016 = vmatprep.subr.bf16.mxu0 0
    %1017 = vmatpush1.bf16.msra.mxu0 0
    %1018 = vmatprep.subr.bf16.mxu0 0
    %1019 = vmatpush1.bf16.msra.mxu0 0
    %1020 = vmatprep.subr.bf16.mxu0 0
    %1021 = vmatpush1.bf16.msra.mxu0 0
    %1022 = vmatprep.subr.bf16.mxu0 0
    %1023 = vmatpush1.bf16.msra.mxu0 0
    %1024 = vmatprep.mubr.bf16.mxu0 0
    %1025 = vmatmul.mubr.bf16.gmra.mrb[0].mxu0 %v990
    %v1026 = vpop.f32.mrb[0].mxu0
    %v1027 = vadd.f32 %v355, %v1026
    %v1028 = vpop.f32.mrb[0].mxu0
    %v1029 = vpop.f32.mrb[0].mxu0
    %v1030 = vpop.f32.mrb[0].mxu0
    %1031 = vdwg.mxu0
    %v1032 = vmul.f32 %v1027, %v1027
    %v1033 = vsel %vm238, %v1032, 0.0
    %1034 = vadd.xlane.f32.xlu0 %v1033
    %v1035 = vpop.xlane.xlu0 %1034
    %v1036 = vadd.f32 %v927, %v1035
    %v1037 = vld [vmem:[#allocation4 + $0x28] sm:$0xff]
    %1039 = vrot.lane.b32.xlu0 %v940, 120
    %v1040 = vpop.permute.xlu0 %1039
    %v1042 = vmul.f32 %v348, %v1040
    %1044 = vrot.lane.b32.xlu0 %v1037, 8
    %v1045 = vpop.permute.xlu0 %1044
    %v1047 = vadd.f32 %v1027, %v1045
    %v1048 = vsel %vm238, %v1042, %v1047
    %v1049 = vadd.f32 %v940, %v1048
    %1050 = vst.msk [vmem:[#allocation3 + $0x30] sm:$0xff] %vm340, %v1049
    %v1051 = vpack.c.bf16 %v1049, %v1049
    %v1052 = vld [vmem:[#allocation2 + $0x38] sm:$0xff]
    %v1054 = vsel %vm340, %v1051, 0
    %1056 = vmatprep.subr.bf16.mxu0 0
    %1057 = vmatpush1.bf16.msra.mxu0 %v373
    %1058 = vmatprep.subr.bf16.mxu0 0
    %1059 = vmatpush1.bf16.msra.mxu0 0
    %1060 = vmatprep.subr.bf16.mxu0 0
    %1061 = vmatpush1.bf16.msra.mxu0 0
    %1062 = vmatprep.subr.bf16.mxu0 0
    %1063 = vmatpush1.bf16.msra.mxu0 0
    %1064 = vmatprep.subr.bf16.mxu0 0
    %1065 = vmatpush1.bf16.msra.mxu0 0
    %1066 = vmatprep.subr.bf16.mxu0 0
    %1067 = vmatpush1.bf16.msra.mxu0 0
    %1068 = vmatprep.subr.bf16.mxu0 0
    %1069 = vmatpush1.bf16.msra.mxu0 0
    %1070 = vmatprep.subr.bf16.mxu0 0
    %1071 = vmatpush1.bf16.msra.mxu0 0
    %1072 = vmatprep.subr.bf16.mxu0 0
    %1073 = vmatpush1.bf16.msra.mxu0 0
    %1074 = vmatprep.subr.bf16.mxu0 0
    %1075 = vmatpush1.bf16.msra.mxu0 0
    %1076 = vmatprep.subr.bf16.mxu0 0
    %1077 = vmatpush1.bf16.msra.mxu0 0
    %1078 = vmatprep.subr.bf16.mxu0 0
    %1079 = vmatpush1.bf16.msra.mxu0 0
    %1080 = vmatprep.subr.bf16.mxu0 0
    %1081 = vmatpush1.bf16.msra.mxu0 0
    %1082 = vmatprep.subr.bf16.mxu0 0
    %1083 = vmatpush1.bf16.msra.mxu0 0
    %1084 = vmatprep.subr.bf16.mxu0 0
    %1085 = vmatpush1.bf16.msra.mxu0 0
    %1086 = vmatprep.subr.bf16.mxu0 0
    %1087 = vmatpush1.bf16.msra.mxu0 0
    %1088 = vmatprep.mubr.bf16.mxu0 0
    %1089 = vmatmul.mubr.bf16.gmra.mrb[0].mxu0 %v1054
    %v1090 = vpop.f32.mrb[0].mxu0
    %v1091 = vadd.f32 %v1052, %v1090
    %v1092 = vpop.f32.mrb[0].mxu0
    %v1093 = vpop.f32.mrb[0].mxu0
    %v1094 = vpop.f32.mrb[0].mxu0
    %1095 = vdwg.mxu0
    %v1096 = vtanh.pop %v1091
    %v1097 = vpack.c.bf16 %v1096, %v1096
    %v1099 = vsel %vm208, %v1097, 0
    %1101 = vmatprep.subr.bf16.mxu0 0
    %1102 = vmatpush1.bf16.msra.mxu0 %v436
    %1103 = vmatprep.subr.bf16.mxu0 0
    %1104 = vmatpush1.bf16.msra.mxu0 %v437
    %1105 = vmatprep.subr.bf16.mxu0 0
    %1106 = vmatpush1.bf16.msra.mxu0 %v438
    %1107 = vmatprep.subr.bf16.mxu0 0
    %1108 = vmatpush1.bf16.msra.mxu0 %v439
    %1109 = vmatprep.subr.bf16.mxu0 0
    %1110 = vmatpush1.bf16.msra.mxu0 0
    %1111 = vmatprep.subr.bf16.mxu0 0
    %1112 = vmatpush1.bf16.msra.mxu0 0
    %1113 = vmatprep.subr.bf16.mxu0 0
    %1114 = vmatpush1.bf16.msra.mxu0 0
    %1115 = vmatprep.subr.bf16.mxu0 0
    %1116 = vmatpush1.bf16.msra.mxu0 0
    %1117 = vmatprep.subr.bf16.mxu0 0
    %1118 = vmatpush1.bf16.msra.mxu0 0
    %1119 = vmatprep.subr.bf16.mxu0 0
    %1120 = vmatpush1.bf16.msra.mxu0 0
    %1121 = vmatprep.subr.bf16.mxu0 0
    %1122 = vmatpush1.bf16.msra.mxu0 0
    %1123 = vmatprep.subr.bf16.mxu0 0
    %1124 = vmatpush1.bf16.msra.mxu0 0
    %1125 = vmatprep.subr.bf16.mxu0 0
    %1126 = vmatpush1.bf16.msra.mxu0 0
    %1127 = vmatprep.subr.bf16.mxu0 0
    %1128 = vmatpush1.bf16.msra.mxu0 0
    %1129 = vmatprep.subr.bf16.mxu0 0
    %1130 = vmatpush1.bf16.msra.mxu0 0
    %1131 = vmatprep.subr.bf16.mxu0 0
    %1132 = vmatpush1.bf16.msra.mxu0 0
    %1133 = vmatprep.mubr.bf16.mxu0 0
    %1134 = vmatmul.mubr.bf16.gmra.mrb[0].mxu0 %v1099
    %v1135 = vpop.f32.mrb[0].mxu0
    %v1136 = vadd.f32 %v355, %v1135
    %v1137 = vpop.f32.mrb[0].mxu0
    %v1138 = vpop.f32.mrb[0].mxu0
    %v1139 = vpop.f32.mrb[0].mxu0
    %1140 = vdwg.mxu0
    %v1141 = vmul.f32 %v1136, %v1136
    %v1142 = vsel %vm238, %v1141, 0.0
    %1143 = vadd.xlane.f32.xlu0 %v1142
    %v1144 = vpop.xlane.xlu0 %1143
    %v1145 = vadd.f32 %v1036, %v1144
    %v1146 = vld [vmem:[#allocation4 + $0x30] sm:$0xff]
    %1148 = vrot.lane.b32.xlu0 %v1049, 120
    %v1149 = vpop.permute.xlu0 %1148
    %v1151 = vmul.f32 %v348, %v1149
    %1153 = vrot.lane.b32.xlu0 %v1146, 8
    %v1154 = vpop.permute.xlu0 %1153
    %v1156 = vadd.f32 %v1136, %v1154
    %v1157 = vsel %vm238, %v1151, %v1156
    %v1158 = vadd.f32 %v1049, %v1157
    %1159 = vst.msk [vmem:[#allocation3 + $0x38] sm:$0xff] %vm340, %v1158
    %v1160 = vld [vmem:[#allocation3] sm:$0xff]
    %v1161 = vld [vmem:[#allocation3 + $0x8] sm:$0xff]
    %v1162 = vld [vmem:[#allocation3 + $0x10] sm:$0xff]
    %v1163 = vld [vmem:[#allocation3 + $0x18] sm:$0xff]
    %v1164 = vld [vmem:[#allocation3 + $0x20] sm:$0xff]
    %v1165 = vld [vmem:[#allocation3 + $0x28] sm:$0xff]
    %v1166 = vld [vmem:[#allocation3 + $0x30] sm:$0xff]
    %v1167 = vld [vmem:[#allocation3 + $0x38] sm:$0xff]
    %v1168 = vld [vmem:[%s10] sm:$0xff]
    %v1169 = vld [vmem:[%s10 + $0x8] sm:$0xff]
    %v1170 = vld [vmem:[%s11] sm:$0x1]
    %v1172 = vlaneseq
    %v1173 = vshrl.u32 %v1172, 7
    %v1174 = vsub.s32 0, %v1173
    %v1175 = vrot.slane %v1170, %v1174
    %v1178 = vsel %vm340, %v1160, 0
    %v1181 = vsel %vm340, %v1161, 0
    %v1184 = vsel %vm340, %v1162, 0
    %v1187 = vsel %vm340, %v1163, 0
    %v1190 = vsel %vm340, %v1164, 0
    %v1193 = vsel %vm340, %v1165, 0
    %v1196 = vsel %vm340, %v1166, 0
    %v1199 = vsel %vm340, %v1167, 0
    %1201 = vmatprep.subr.mxu0 0.0
    %1202 = vmatpush1.msra.mxu0 %v1168
    %1203 = vmatprep.subr.mxu0 0.0
    %1204 = vmatpush1.msra.mxu0 %v1169
    %1205 = vmatprep.subr.mxu0 0.0
    %1206 = vmatpush1.msra.mxu0 0.0
    %1207 = vmatprep.subr.mxu0 0.0
    %1208 = vmatpush1.msra.mxu0 0.0
    %1209 = vmatprep.subr.mxu0 0.0
    %1210 = vmatpush1.msra.mxu0 0.0
    %1211 = vmatprep.subr.mxu0 0.0
    %1212 = vmatpush1.msra.mxu0 0.0
    %1213 = vmatprep.subr.mxu0 0.0
    %1214 = vmatpush1.msra.mxu0 0.0
    %1215 = vmatprep.subr.mxu0 0.0
    %1216 = vmatpush1.msra.mxu0 0.0
    %1217 = vmatprep.subr.mxu0 0.0
    %1218 = vmatpush1.msra.mxu0 0.0
    %1219 = vmatprep.subr.mxu0 0.0
    %1220 = vmatpush1.msra.mxu0 0.0
    %1221 = vmatprep.subr.mxu0 0.0
    %1222 = vmatpush1.msra.mxu0 0.0
    %1223 = vmatprep.subr.mxu0 0.0
    %1224 = vmatpush1.msra.mxu0 0.0
    %1225 = vmatprep.subr.mxu0 0.0
    %1226 = vmatpush1.msra.mxu0 0.0
    %1227 = vmatprep.subr.mxu0 0.0
    %1228 = vmatpush1.msra.mxu0 0.0
    %1229 = vmatprep.subr.mxu0 0.0
    %1230 = vmatpush1.msra.mxu0 0.0
    %1231 = vmatprep.subr.mxu0 0.0
    %1232 = vmatpush1.msra.mxu0 0.0
    %1233 = vmatprep.subr.mxu0 0.0
    %1234 = vmatpush1.msra.mxu0 0.0
    %1235 = vmatprep.subr.mxu0 0.0
    %1236 = vmatpush1.msra.mxu0 0.0
    %1237 = vmatprep.subr.mxu0 0.0
    %1238 = vmatpush1.msra.mxu0 0.0
    %1239 = vmatprep.subr.mxu0 0.0
    %1240 = vmatpush1.msra.mxu0 0.0
    %1241 = vmatprep.subr.mxu0 0.0
    %1242 = vmatpush1.msra.mxu0 0.0
    %1243 = vmatprep.subr.mxu0 0.0
    %1244 = vmatpush1.msra.mxu0 0.0
    %1245 = vmatprep.subr.mxu0 0.0
    %1246 = vmatpush1.msra.mxu0 0.0
    %1247 = vmatprep.subr.mxu0 0.0
    %1248 = vmatpush1.msra.mxu0 0.0
    %1249 = vmatprep.subr.mxu0 0.0
    %1250 = vmatpush1.msra.mxu0 0.0
    %1251 = vmatprep.subr.mxu0 0.0
    %1252 = vmatpush1.msra.mxu0 0.0
    %1253 = vmatprep.subr.mxu0 0.0
    %1254 = vmatpush1.msra.mxu0 0.0
    %1255 = vmatprep.subr.mxu0 0.0
    %1256 = vmatpush1.msra.mxu0 0.0
    %1257 = vmatprep.subr.mxu0 0.0
    %1258 = vmatpush1.msra.mxu0 0.0
    %1259 = vmatprep.subr.mxu0 0.0
    %1260 = vmatpush1.msra.mxu0 0.0
    %1261 = vmatprep.subr.mxu0 0.0
    %1262 = vmatpush1.msra.mxu0 0.0
    %1263 = vmatprep.subr.mxu0 0.0
    %1264 = vmatpush1.msra.mxu0 0.0
    %1265 = vmatprep.mubr.f32.mxu0 0.0
    %1266 = vmatmul.mubr.f32.gmra.mrb[0].mxu0 %v1178
    %v1267 = vpop.f32.mrb[0].mxu0
    %v1268 = vadd.f32 %v1175, %v1267
    %v1269 = vpop.f32.mrb[0].mxu0
    %1270 = vmatprep.mubr.f32.mxu0 0.0
    %1271 = vmatmul.mubr.f32.gmra.mrb[0].mxu0 %v1181
    %v1272 = vpop.f32.mrb[0].mxu0
    %v1273 = vadd.f32 %v1175, %v1272
    %v1274 = vpop.f32.mrb[0].mxu0
    %1275 = vmatprep.mubr.f32.mxu0 0.0
    %1276 = vmatmul.mubr.f32.gmra.mrb[0].mxu0 %v1184
    %v1277 = vpop.f32.mrb[0].mxu0
    %v1278 = vadd.f32 %v1175, %v1277
    %v1279 = vpop.f32.mrb[0].mxu0
    %1280 = vmatprep.mubr.f32.mxu0 0.0
    %1281 = vmatmul.mubr.f32.gmra.mrb[0].mxu0 %v1187
    %v1282 = vpop.f32.mrb[0].mxu0
    %v1283 = vadd.f32 %v1175, %v1282
    %v1284 = vpop.f32.mrb[0].mxu0
    %1285 = vmatprep.mubr.f32.mxu0 0.0
    %1286 = vmatmul.mubr.f32.gmra.mrb[0].mxu0 %v1190
    %v1287 = vpop.f32.mrb[0].mxu0
    %v1288 = vadd.f32 %v1175, %v1287
    %v1289 = vpop.f32.mrb[0].mxu0
    %1290 = vmatprep.mubr.f32.mxu0 0.0
    %1291 = vmatmul.mubr.f32.gmra.mrb[0].mxu0 %v1193
    %v1292 = vpop.f32.mrb[0].mxu0
    %v1293 = vadd.f32 %v1175, %v1292
    %v1294 = vpop.f32.mrb[0].mxu0
    %1295 = vmatprep.mubr.f32.mxu0 0.0
    %1296 = vmatmul.mubr.f32.gmra.mrb[0].mxu0 %v1196
    %v1297 = vpop.f32.mrb[0].mxu0
    %v1298 = vadd.f32 %v1175, %v1297
    %v1299 = vpop.f32.mrb[0].mxu0
    %1300 = vmatprep.mubr.f32.mxu0 0.0
    %1301 = vmatmul.mubr.f32.gmra.mrb[0].mxu0 %v1199
    %v1302 = vpop.f32.mrb[0].mxu0
    %v1303 = vadd.f32 %v1175, %v1302
    %v1304 = vpop.f32.mrb[0].mxu0
    %1305 = vdwg.mxu0
    %v1306 = vsub.f32 %v58, %v1268
    %v1307 = vsub.f32 %v59, %v1273
    %v1308 = vsub.f32 %v60, %v1278
    %v1309 = vsub.f32 %v61, %v1283
    %v1310 = vsub.f32 %v62, %v1288
    %v1311 = vsub.f32 %v63, %v1293
    %v1312 = vsub.f32 %v64, %v1298
    %v1313 = vsub.f32 %v65, %v1303
    %v1314 = vmul.f32 %v1306, %v1306
    %v1315 = vmul.f32 %v1307, %v1307
    %v1316 = vmul.f32 %v1308, %v1308
    %v1317 = vmul.f32 %v1309, %v1309
    %v1318 = vmul.f32 %v1310, %v1310
    %v1319 = vmul.f32 %v1311, %v1311
    %v1320 = vmul.f32 %v1312, %v1312
    %v1321 = vmul.f32 %v1313, %v1313
    %v1322 = vsub.f32 0.0, %v1314
    %v1323 = vsub.f32 0.0, %v1315
    %v1324 = vsub.f32 0.0, %v1316
    %v1325 = vsub.f32 0.0, %v1317
    %v1326 = vsub.f32 0.0, %v1318
    %v1327 = vsub.f32 0.0, %v1319
    %v1328 = vsub.f32 0.0, %v1320
    %v1329 = vsub.f32 0.0, %v1321
    %v1330 = vmul.f32 %v1322, 50.0
    %v1331 = vmul.f32 %v1323, 50.0
    %v1332 = vmul.f32 %v1324, 50.0
    %v1333 = vmul.f32 %v1325, 50.0
    %v1334 = vmul.f32 %v1326, 50.0
    %v1335 = vmul.f32 %v1327, 50.0
    %v1336 = vmul.f32 %v1328, 50.0
    %v1337 = vmul.f32 %v1329, 50.0
    %v1338 = vsub.f32 %v1330, -1.3836466
    %v1339 = vsub.f32 %v1331, -1.3836466
    %v1340 = vsub.f32 %v1332, -1.3836466
    %v1341 = vsub.f32 %v1333, -1.3836466
    %v1342 = vsub.f32 %v1334, -1.3836466
    %v1343 = vsub.f32 %v1335, -1.3836466
    %v1344 = vsub.f32 %v1336, -1.3836466
    %v1345 = vsub.f32 %v1337, -1.3836466
    %v1346 = vsel %vm74, %v1338, 0.0
    %1347 = vadd.xlane.f32.xlu0 %v1346
    %v1348 = vpop.xlane.xlu0 %1347
    %v1349 = vsel %vm74, %v1339, 0.0
    %1350 = vadd.xlane.f32.xlu0 %v1349
    %v1351 = vpop.xlane.xlu0 %1350
    %v1352 = vsel %vm74, %v1340, 0.0
    %1353 = vadd.xlane.f32.xlu0 %v1352
    %v1354 = vpop.xlane.xlu0 %1353
    %v1355 = vsel %vm74, %v1341, 0.0
    %1356 = vadd.xlane.f32.xlu0 %v1355
    %v1357 = vpop.xlane.xlu0 %1356
    %v1358 = vsel %vm74, %v1342, 0.0
    %1359 = vadd.xlane.f32.xlu0 %v1358
    %v1360 = vpop.xlane.xlu0 %1359
    %v1361 = vsel %vm74, %v1343, 0.0
    %1362 = vadd.xlane.f32.xlu0 %v1361
    %v1363 = vpop.xlane.xlu0 %1362
    %v1364 = vsel %vm74, %v1344, 0.0
    %1365 = vadd.xlane.f32.xlu0 %v1364
    %v1366 = vpop.xlane.xlu0 %1365
    %v1367 = vsel %vm74, %v1345, 0.0
    %1368 = vadd.xlane.f32.xlu0 %v1367
    %v1369 = vpop.xlane.xlu0 %1368
    %v1370 = vadd.f32 %v1348, %v1351
    %v1371 = vadd.f32 %v1370, %v1354
    %v1372 = vadd.f32 %v1371, %v1357
    %v1373 = vadd.f32 %v1372, %v1360
    %v1374 = vadd.f32 %v1373, %v1363
    %v1375 = vadd.f32 %v1374, %v1366
    %v1376 = vadd.f32 %v1375, %v1369
    %v1377 = vrot.slane %v1376, 4
    %v1378 = vadd.f32 %v1376, %v1377
    %v1379 = vrot.slane %v1378, 2
    %v1380 = vadd.f32 %v1378, %v1379
    %v1381 = vrot.slane %v1380, 1
    %v1382 = vadd.f32 %v1380, %v1381
    %v1383 = vrcp.pop 8.0
    %v1384 = vmul.f32 %v1382, %v1383
    %v1385 = vsub.f32 0.0, %v1384
    %vm1386 = vcmask 0
    %1387 = vst.msk [vmem:[#allocation5] sm:$0x1] %vm1386, %v1385
    %v1388 = vld [vmem:[%s14] sm:$0x1]
    %v1389 = vld [vmem:[%s15] sm:$0x1]
    %v1390 = vmul.f32 %v324, 2.0
    %v1391 = vmul.f32 %v1390, 1.442695
    %v1392 = vpow.pop %v1391
    %v1393 = vmul.f32 %v1389, 2.0
    %v1394 = vmul.f32 %v1393, 1.442695
    %v1395 = vpow.pop %v1394
    %v1397 = vlaneseq
    %v1398 = vshrl.u32 %v1397, 7
    %v1399 = vsub.s32 0, %v1398
    %v1400 = vrot.slane %v1389, %v1399
    %1403 = vrot.lane.b32.xlu0 %v324, 112
    %v1404 = vpop.permute.xlu0 %1403
    %v1406 = vsub.f32 %v1400, %v1404
    %v1408 = vlaneseq
    %v1409 = vshrl.u32 %v1408, 7
    %v1410 = vsub.s32 0, %v1409
    %v1411 = vrot.slane %v1388, %v1410
    %v1413 = vsub.f32 %v324, %v1411
    %v1414 = vmul.f32 %v1413, %v1413
    %1416 = vrot.lane.b32.xlu0 %v1414, 16
    %v1417 = vpop.permute.xlu0 %1416
    %v1419 = vadd.f32 %v1392, %v1417
    %v1420 = vmul.f32 %v1395, 2.0
    %v1422 = vlaneseq
    %v1423 = vshrl.u32 %v1422, 7
    %v1424 = vsub.s32 0, %v1423
    %v1425 = vrot.slane %v1420, %v1424
    %1426 = vrot.lane.b32.xlu0 %v1425, 16
    %v1427 = vpop.permute.xlu0 %1426
    %v1429 = vrcp.pop %v1427
    %v1430 = vmul.f32 %v1419, %v1429
    %1432 = vrot.lane.b32.xlu0 %v1430, 112
    %v1433 = vpop.permute.xlu0 %1432
    %v1435 = vadd.f32 %v1406, %v1433
    %v1436 = vsub.f32 %v1435, 0.5
    %v1437 = vsel %vm340, %v1436, 0.0
    %1438 = vadd.xlane.f32.xlu0 %v1437
    %v1439 = vpop.xlane.xlu0 %1438
    %v1440 = vrot.slane %v1439, 4
    %v1441 = vadd.f32 %v1439, %v1440
    %v1442 = vrot.slane %v1441, 2
    %v1443 = vadd.f32 %v1441, %v1442
    %v1444 = vrot.slane %v1443, 1
    %v1445 = vadd.f32 %v1443, %v1444
    %v1446 = vmul.f32 %v1445, %v1383
    %v1447 = vrot.slane %v1145, 4
    %v1448 = vadd.f32 %v1145, %v1447
    %v1449 = vrot.slane %v1448, 2
    %v1450 = vadd.f32 %v1448, %v1449
    %v1451 = vrot.slane %v1450, 1
    %v1452 = vadd.f32 %v1450, %v1451
    %v1453 = vmul.f32 %v1452, %v1383
    %v1454 = vadd.f32 %v1453, %v1446
    %1455 = vst.msk [vmem:[#allocation7] sm:$0x1] %vm1386, %v1454
    // Predicated region
    $region66: #{tpu_custom_call.1} parent=1 // pred_check
      _
    $region67: #{tpu_custom_call.1} parent=1 // pred_check_branch
      %1457 = sbr.rel (0) target = $region69
    $region68: #{tpu_custom_call.1} parent=1 // pred_region
      %s1459 = ssub.s32 16, 16
      %1460 = vsyncadd [#allocation6], %s1459
      %s1462 = sshll.u32 [#allocation5], 4
      %s1463 = int_to_ptr.vmem [resolvable:$true] %s1462
      %1465 = dma.vmem_to_hbm [thread:$0]  %s1463, 16, %s16, [#allocation6]
    $region69: #{tpu_custom_call.1} parent=1 // pred_fallthru
      _
    // Predicated region
    $region70: #{tpu_custom_call.1} parent=1 // pred_check
      _
    $region71: #{tpu_custom_call.1} parent=1 // pred_check_branch
      %1467 = sbr.rel (0) target = $region73
    $region72: #{tpu_custom_call.1} parent=1 // pred_region
      %s1469 = ssub.s32 16, 16
      %1470 = vsyncadd [#allocation8], %s1469
      %s1472 = sshll.u32 [#allocation7], 4
      %s1473 = int_to_ptr.vmem [resolvable:$true] %s1472
      %1475 = dma.vmem_to_hbm [thread:$0]  %s1473, 16, %s17, [#allocation8]
    $region73: #{tpu_custom_call.1} parent=1 // pred_fallthru
      _
    // Predicated region
    $region74: #{tpu_custom_call.1} parent=1 // pred_check
      _
    $region75: #{tpu_custom_call.1} parent=1 // pred_check_branch
      %1477 = sbr.rel (0) target = $region77
    $region76: #{tpu_custom_call.1} parent=1 // pred_region
      %1478 = dma.done [#allocation6], 16
    $region77: #{tpu_custom_call.1} parent=1 // pred_fallthru
      _
    // Predicated region
    $region78: #{tpu_custom_call.1} parent=1 // pred_check
      _
    $region79: #{tpu_custom_call.1} parent=1 // pred_check_branch
      %1480 = sbr.rel (0) target = $region81
    $region80: #{tpu_custom_call.1} parent=1 // pred_region
      %1481 = dma.done [#allocation8], 16
    $region81: #{tpu_custom_call.1} parent=1 // pred_fallthru
      _
    %1482 = vsyncpa [#allocation6], 1
    %1483 = vsyncpa [#allocation8], 1

</llo_original>
